<compile_context>
chip_gen: v6e
topology: v6e:2x2x1
jax: 0.10.0
libtpu: 0.0.40
codegen_flags: <defaults>
</compile_context>

<pallas_src>
import jax
import jax.numpy as jnp
import numpy as np
from jax import lax
from jax.experimental import pallas as pl
from jax.experimental.pallas import tpu as pltpu

SEQ_LEN = 8
HIDDEN = 32
VOCAB = 64       # input_size
LANE = 128       # lane-padded per-gate width; each GRU gate occupies one 128-lane span


def gru_encoder_kernel(ids_ref, gxt_ref, whh_ref, bhn_ref, h0_ref, out_ref):
    """Single-layer GRU over the whole (short) sequence, batch=1.

    ids_ref : (S, 1) int32   token ids (VMEM)
    gxt_ref : (V, 3*HP)      fused table: emb @ W_ih^T (+ b_ih, + b_hh for r/z),
                             gates [r, z, n], each gate lane-aligned to 128
    whh_ref : (H, 3*HP)      W_hh^T, contraction dim NOT padded
    bhn_ref : (1, HP)        b_hh for the n gate (must stay inside r*(...))
    h0_ref  : (1, HP)        lane-padded initial hidden state
    out_ref : (S, HP)        per-step hidden states (lane-dense store)
    """
    S, HP = out_ref.shape
    V = gxt_ref.shape[0]
    H = whh_ref.shape[0]

    # Fused embedding gather + input projection: one-hot (S,V) @ (V,3*HP) on MXU.
    ids = ids_ref[...]                                                # (S, 1)
    onehot = (lax.broadcasted_iota(jnp.int32, (S, V), 1) == ids).astype(jnp.float32)
    gx = jnp.dot(onehot, gxt_ref[...], preferred_element_type=jnp.float32)  # (S, 3*HP)

    whh = whh_ref[...]                     # (H, 3*HP), loaded once
    bhn = bhn_ref[...]                     # (1, HP)

    h = h0_ref[...]                        # carried in vregs across the unrolled loop
    outs = []
    for t in range(S):                     # fully unrolled: S is tiny and static
        gx_t = gx[t:t + 1, :]              # (1, 3*HP), lane-aligned gate spans
        # De-padded contraction: only the first H lanes of h feed the recurrence.
        gh = jnp.dot(h[:, :H], whh, preferred_element_type=jnp.float32)     # (1, 3*HP)
        rz = jax.nn.sigmoid(gx_t[:, :2 * HP] + gh[:, :2 * HP])              # one EUP pass
        r = rz[:, :HP]
        z = rz[:, HP:]
        n = jnp.tanh(gx_t[:, 2 * HP:] + r * (gh[:, 2 * HP:] + bhn))
        h = (1.0 - z) * n + z * h
        outs.append(h)

    out_ref[...] = jnp.concatenate(outs, axis=0)   # single lane-dense (S, HP) store


def pack_gru_params(params):
    """One-time offline packing of (emb, W_ih, W_hh, b_ih, b_hh).

    Fuses the embedding table with W_ih^T (and the r/z biases) into a per-token
    gx table, and lane-pads only the gate-output dimension.  Run once; cache
    the result — nothing here sits on the per-call path.
    """
    emb_table, w_ih, w_hh, b_ih, b_hh = (np.asarray(p, np.float32) for p in params)
    V, H = emb_table.shape
    HP = LANE

    wih_t = w_ih.T                         # (H, 3H)
    whh_t = w_hh.T                         # (H, 3H)

    gxt = np.zeros((V, 3 * HP), np.float32)      # emb @ W_ih^T + biases, per gate
    whh_p = np.zeros((H, 3 * HP), np.float32)    # contraction dim kept at H (no padding)
    for g in range(3):
        gx_g = emb_table @ wih_t[:, g * H:(g + 1) * H] + b_ih[g * H:(g + 1) * H]
        if g < 2:                                 # b_hh folded for r/z gates only
            gx_g = gx_g + b_hh[g * H:(g + 1) * H]
        gxt[:, g * HP:g * HP + H] = gx_g
        whh_p[:, g * HP:g * HP + H] = whh_t[:, g * H:(g + 1) * H]

    bhn_p = np.zeros((1, HP), np.float32)         # b_hh(n) stays inside r*(...)
    bhn_p[0, :H] = b_hh[2 * H:3 * H]

    return (jnp.asarray(gxt), jnp.asarray(whh_p), jnp.asarray(bhn_p))


@jax.jit
def encoder_rnn_forward(word_inputs, hidden, packed):
    """Equivalent of EncoderRNN.forward(word_inputs, hidden) for n_layers=1."""
    gxt_p, whh_p, bhn_p = packed
    S = word_inputs.shape[0]
    V = gxt_p.shape[0]
    H = hidden.shape[-1]
    HP = LANE

    # Only runtime-dependent prep remains in the jitted path.
    ids2d = word_inputs.astype(jnp.int32).reshape(S, 1)
    h0_p = jnp.zeros((1, HP), jnp.float32).at[:, :H].set(hidden[0])

    out_p = pl.pallas_call(
        gru_encoder_kernel,
        out_shape=jax.ShapeDtypeStruct((S, HP), jnp.float32),
        grid=(1,),
        in_specs=[
            pl.BlockSpec((S, 1), lambda i: (0, 0)),
            pl.BlockSpec((V, 3 * HP), lambda i: (0, 0)),
            pl.BlockSpec((H, 3 * HP), lambda i: (0, 0)),
            pl.BlockSpec((1, HP), lambda i: (0, 0)),
            pl.BlockSpec((1, HP), lambda i: (0, 0)),
        ],
        out_specs=pl.BlockSpec((S, HP), lambda i: (0, 0)),
        compiler_params=pltpu.CompilerParams(dimension_semantics=("arbitrary",)),
    )(ids2d, gxt_p, whh_p, bhn_p, h0_p)

    out = out_p[:, :H]                     # strip lane padding
    # Match torch shapes: output (seq_len, 1, hidden), hidden (n_layers=1, 1, hidden);
    # final hidden is the last row of the single output (no separate hn writeback).
    return out[:, None, :], out_p[S - 1:S, :H][None, :, :]


def gru_reference(embedded, h0, w_ih, w_hh, b_ih, b_hh):
    """Pure-JAX reference of the PyTorch GRU cell (gate order r, z, n)."""
    H = h0.shape[-1]

    def cell(h, x):
        gx = x @ w_ih.T + b_ih
        gh = h @ w_hh.T + b_hh
        r = jax.nn.sigmoid(gx[0:H] + gh[0:H])
        z = jax.nn.sigmoid(gx[H:2 * H] + gh[H:2 * H])
        n = jnp.tanh(gx[2 * H:3 * H] + r * gh[2 * H:3 * H])
        h_new = (1.0 - z) * n + z * h
        return h_new, h_new

    hN, outs = lax.scan(cell, h0[0, 0], embedded)
    return outs, hN


if __name__ == "__main__":
    key = jax.random.PRNGKey(0)
    k_emb, k_wih, k_whh, k_bih, k_bhh, k_ids = jax.random.split(key, 6)

    scale = 1.0 / np.sqrt(HIDDEN)
    emb_table = jax.random.normal(k_emb, (VOCAB, HIDDEN), jnp.float32)
    w_ih = jax.random.uniform(k_wih, (3 * HIDDEN, HIDDEN), jnp.float32, -scale, scale)
    w_hh = jax.random.uniform(k_whh, (3 * HIDDEN, HIDDEN), jnp.float32, -scale, scale)
    b_ih = jax.random.uniform(k_bih, (3 * HIDDEN,), jnp.float32, -scale, scale)
    b_hh = jax.random.uniform(k_bhh, (3 * HIDDEN,), jnp.float32, -scale, scale)
    params = (emb_table, w_ih, w_hh, b_ih, b_hh)

    # Token ids must be < VOCAB (dynamic one-hot gather has no bounds check).
    word_inputs = jax.random.randint(k_ids, (SEQ_LEN,), 0, VOCAB, jnp.int32)
    hidden0 = jnp.zeros((1, 1, HIDDEN), jnp.float32)  # EncoderRNN.init_hidden()

    packed = pack_gru_params(params)       # one-time packing, cached outside forward
    output, hidden_n = encoder_rnn_forward(word_inputs, hidden0, packed)
    output = jax.block_until_ready(output)
    hidden_n = jax.block_until_ready(hidden_n)

    # Sanity check against a pure-JAX GRU reference.
    embedded = jnp.take(emb_table, word_inputs, axis=0)
    ref_out, ref_hn = gru_reference(embedded, hidden0, w_ih, w_hh, b_ih, b_hh)
    assert output.shape == (SEQ_LEN, 1, HIDDEN)
    assert hidden_n.shape == (1, 1, HIDDEN)
    np.testing.assert_allclose(np.asarray(output[:, 0, :]), np.asarray(ref_out),
                               rtol=1e-5, atol=1e-5)
    np.testing.assert_allclose(np.asarray(hidden_n[0, 0]), np.asarray(ref_hn),
                               rtol=1e-5, atol=1e-5)

    print("KERNEL_OK")
</pallas_src>

<mosaic_0001>
module attributes {stable_mosaic.version = 11 : i64} {
  func.func @gru_encoder_kernel(%arg0: i32, %arg1: memref<8x1xi32, #tpu.memory_space<vmem>>, %arg2: memref<64x384xf32, #tpu.memory_space<vmem>>, %arg3: memref<32x384xf32, #tpu.memory_space<vmem>>, %arg4: memref<1x128xf32, #tpu.memory_space<vmem>>, %arg5: memref<1x128xf32, #tpu.memory_space<vmem>>, %arg6: memref<8x128xf32, #tpu.memory_space<vmem>>) attributes {dimension_semantics = [#tpu.dimension_semantics<arbitrary>], iteration_bounds = array<i64: 1>, scalar_prefetch = 0 : i64, scratch_operands = 0 : i64, tpu.core_type = #tpu.core_type<tc>, window_params = [{pipeline_mode = #tpu.pipeline_mode<synchronous>, transform_indices = @transform_0, window_bounds = array<i64: 8, 1>}, {pipeline_mode = #tpu.pipeline_mode<synchronous>, transform_indices = @transform_1, window_bounds = array<i64: 64, 384>}, {pipeline_mode = #tpu.pipeline_mode<synchronous>, transform_indices = @transform_2, window_bounds = array<i64: 32, 384>}, {pipeline_mode = #tpu.pipeline_mode<synchronous>, transform_indices = @transform_3, window_bounds = array<i64: 1, 128>}, {pipeline_mode = #tpu.pipeline_mode<synchronous>, transform_indices = @transform_4, window_bounds = array<i64: 1, 128>}, {pipeline_mode = #tpu.pipeline_mode<synchronous>, transform_indices = @transform_5, window_bounds = array<i64: 8, 128>}]} {
    %c0 = arith.constant 0 : index
    %c0_0 = arith.constant 0 : index
    %0 = vector.load %arg1[%c0, %c0_0] : memref<8x1xi32, #tpu.memory_space<vmem>>, vector<8x1xi32>
    %1 = tpu.iota {dimensions = array<i32: 1>} : vector<8x64xi32>
    %2 = vector.broadcast %0 : vector<8x1xi32> to vector<8x64xi32>
    %3 = arith.cmpi eq, %1, %2 : vector<8x64xi32>
    %4 = arith.extui %3 : vector<8x64xi1> to vector<8x64xi32>
    %5 = arith.sitofp %4 : vector<8x64xi32> to vector<8x64xf32>
    %c0_1 = arith.constant 0 : index
    %c0_2 = arith.constant 0 : index
    %6 = vector.load %arg2[%c0_1, %c0_2] : memref<64x384xf32, #tpu.memory_space<vmem>>, vector<64x384xf32>
    %cst = arith.constant dense<0.000000e+00> : vector<8x384xf32>
    %7 = tpu.matmul %5, %6, %cst {dimension_numbers = #tpu.dot_dimension_numbers<[1], [0], [0], [1], [0, 0, 1, 1], [], []>} : vector<8x64xf32>, vector<64x384xf32>, vector<8x384xf32> -> vector<8x384xf32>
    %c0_3 = arith.constant 0 : index
    %c0_4 = arith.constant 0 : index
    %8 = vector.load %arg3[%c0_3, %c0_4] : memref<32x384xf32, #tpu.memory_space<vmem>>, vector<32x384xf32>
    %c0_5 = arith.constant 0 : index
    %c0_6 = arith.constant 0 : index
    %9 = vector.load %arg4[%c0_5, %c0_6] : memref<1x128xf32, #tpu.memory_space<vmem>>, vector<1x128xf32>
    %c0_7 = arith.constant 0 : index
    %c0_8 = arith.constant 0 : index
    %10 = vector.load %arg5[%c0_7, %c0_8] : memref<1x128xf32, #tpu.memory_space<vmem>>, vector<1x128xf32>
    %11 = vector.extract_strided_slice %7 {offsets = [0, 0], sizes = [1, 384], strides = [1, 1]} : vector<8x384xf32> to vector<1x384xf32>
    %12 = vector.extract_strided_slice %10 {offsets = [0, 0], sizes = [1, 32], strides = [1, 1]} : vector<1x128xf32> to vector<1x32xf32>
    %cst_9 = arith.constant dense<0.000000e+00> : vector<1x384xf32>
    %13 = tpu.matmul %12, %8, %cst_9 {dimension_numbers = #tpu.dot_dimension_numbers<[1], [0], [0], [1], [0, 0, 1, 1], [], []>} : vector<1x32xf32>, vector<32x384xf32>, vector<1x384xf32> -> vector<1x384xf32>
    %14 = vector.extract_strided_slice %11 {offsets = [0, 0], sizes = [1, 256], strides = [1, 1]} : vector<1x384xf32> to vector<1x256xf32>
    %15 = vector.extract_strided_slice %13 {offsets = [0, 0], sizes = [1, 256], strides = [1, 1]} : vector<1x384xf32> to vector<1x256xf32>
    %16 = arith.addf %14, %15 : vector<1x256xf32>
    %17 = arith.negf %16 : vector<1x256xf32>
    %18 = math.exp %17 : vector<1x256xf32>
    %cst_10 = arith.constant 1.000000e+00 : f32
    %19 = vector.broadcast %cst_10 : f32 to vector<1x256xf32>
    %20 = arith.addf %19, %18 : vector<1x256xf32>
    %21 = arith.divf %19, %20 : vector<1x256xf32>
    %22 = vector.extract_strided_slice %21 {offsets = [0, 0], sizes = [1, 128], strides = [1, 1]} : vector<1x256xf32> to vector<1x128xf32>
    %23 = vector.extract_strided_slice %21 {offsets = [0, 128], sizes = [1, 128], strides = [1, 1]} : vector<1x256xf32> to vector<1x128xf32>
    %24 = vector.extract_strided_slice %11 {offsets = [0, 256], sizes = [1, 128], strides = [1, 1]} : vector<1x384xf32> to vector<1x128xf32>
    %25 = vector.extract_strided_slice %13 {offsets = [0, 256], sizes = [1, 128], strides = [1, 1]} : vector<1x384xf32> to vector<1x128xf32>
    %26 = arith.addf %25, %9 : vector<1x128xf32>
    %27 = arith.mulf %22, %26 : vector<1x128xf32>
    %28 = arith.addf %24, %27 : vector<1x128xf32>
    %29 = math.tanh %28 : vector<1x128xf32>
    %cst_11 = arith.constant 1.000000e+00 : f32
    %30 = vector.broadcast %cst_11 : f32 to vector<1x128xf32>
    %31 = arith.subf %30, %23 : vector<1x128xf32>
    %32 = arith.mulf %31, %29 : vector<1x128xf32>
    %33 = arith.mulf %23, %10 : vector<1x128xf32>
    %34 = arith.addf %32, %33 : vector<1x128xf32>
    %35 = vector.extract_strided_slice %7 {offsets = [1, 0], sizes = [1, 384], strides = [1, 1]} : vector<8x384xf32> to vector<1x384xf32>
    %36 = vector.extract_strided_slice %34 {offsets = [0, 0], sizes = [1, 32], strides = [1, 1]} : vector<1x128xf32> to vector<1x32xf32>
    %cst_12 = arith.constant dense<0.000000e+00> : vector<1x384xf32>
    %37 = tpu.matmul %36, %8, %cst_12 {dimension_numbers = #tpu.dot_dimension_numbers<[1], [0], [0], [1], [0, 0, 1, 1], [], []>} : vector<1x32xf32>, vector<32x384xf32>, vector<1x384xf32> -> vector<1x384xf32>
    %38 = vector.extract_strided_slice %35 {offsets = [0, 0], sizes = [1, 256], strides = [1, 1]} : vector<1x384xf32> to vector<1x256xf32>
    %39 = vector.extract_strided_slice %37 {offsets = [0, 0], sizes = [1, 256], strides = [1, 1]} : vector<1x384xf32> to vector<1x256xf32>
    %40 = arith.addf %38, %39 : vector<1x256xf32>
    %41 = arith.negf %40 : vector<1x256xf32>
    %42 = math.exp %41 : vector<1x256xf32>
    %cst_13 = arith.constant 1.000000e+00 : f32
    %43 = vector.broadcast %cst_13 : f32 to vector<1x256xf32>
    %44 = arith.addf %43, %42 : vector<1x256xf32>
    %45 = arith.divf %43, %44 : vector<1x256xf32>
    %46 = vector.extract_strided_slice %45 {offsets = [0, 0], sizes = [1, 128], strides = [1, 1]} : vector<1x256xf32> to vector<1x128xf32>
    %47 = vector.extract_strided_slice %45 {offsets = [0, 128], sizes = [1, 128], strides = [1, 1]} : vector<1x256xf32> to vector<1x128xf32>
    %48 = vector.extract_strided_slice %35 {offsets = [0, 256], sizes = [1, 128], strides = [1, 1]} : vector<1x384xf32> to vector<1x128xf32>
    %49 = vector.extract_strided_slice %37 {offsets = [0, 256], sizes = [1, 128], strides = [1, 1]} : vector<1x384xf32> to vector<1x128xf32>
    %50 = arith.addf %49, %9 : vector<1x128xf32>
    %51 = arith.mulf %46, %50 : vector<1x128xf32>
    %52 = arith.addf %48, %51 : vector<1x128xf32>
    %53 = math.tanh %52 : vector<1x128xf32>
    %cst_14 = arith.constant 1.000000e+00 : f32
    %54 = vector.broadcast %cst_14 : f32 to vector<1x128xf32>
    %55 = arith.subf %54, %47 : vector<1x128xf32>
    %56 = arith.mulf %55, %53 : vector<1x128xf32>
    %57 = arith.mulf %47, %34 : vector<1x128xf32>
    %58 = arith.addf %56, %57 : vector<1x128xf32>
    %59 = vector.extract_strided_slice %7 {offsets = [2, 0], sizes = [1, 384], strides = [1, 1]} : vector<8x384xf32> to vector<1x384xf32>
    %60 = vector.extract_strided_slice %58 {offsets = [0, 0], sizes = [1, 32], strides = [1, 1]} : vector<1x128xf32> to vector<1x32xf32>
    %cst_15 = arith.constant dense<0.000000e+00> : vector<1x384xf32>
    %61 = tpu.matmul %60, %8, %cst_15 {dimension_numbers = #tpu.dot_dimension_numbers<[1], [0], [0], [1], [0, 0, 1, 1], [], []>} : vector<1x32xf32>, vector<32x384xf32>, vector<1x384xf32> -> vector<1x384xf32>
    %62 = vector.extract_strided_slice %59 {offsets = [0, 0], sizes = [1, 256], strides = [1, 1]} : vector<1x384xf32> to vector<1x256xf32>
    %63 = vector.extract_strided_slice %61 {offsets = [0, 0], sizes = [1, 256], strides = [1, 1]} : vector<1x384xf32> to vector<1x256xf32>
    %64 = arith.addf %62, %63 : vector<1x256xf32>
    %65 = arith.negf %64 : vector<1x256xf32>
    %66 = math.exp %65 : vector<1x256xf32>
    %cst_16 = arith.constant 1.000000e+00 : f32
    %67 = vector.broadcast %cst_16 : f32 to vector<1x256xf32>
    %68 = arith.addf %67, %66 : vector<1x256xf32>
    %69 = arith.divf %67, %68 : vector<1x256xf32>
    %70 = vector.extract_strided_slice %69 {offsets = [0, 0], sizes = [1, 128], strides = [1, 1]} : vector<1x256xf32> to vector<1x128xf32>
    %71 = vector.extract_strided_slice %69 {offsets = [0, 128], sizes = [1, 128], strides = [1, 1]} : vector<1x256xf32> to vector<1x128xf32>
    %72 = vector.extract_strided_slice %59 {offsets = [0, 256], sizes = [1, 128], strides = [1, 1]} : vector<1x384xf32> to vector<1x128xf32>
    %73 = vector.extract_strided_slice %61 {offsets = [0, 256], sizes = [1, 128], strides = [1, 1]} : vector<1x384xf32> to vector<1x128xf32>
    %74 = arith.addf %73, %9 : vector<1x128xf32>
    %75 = arith.mulf %70, %74 : vector<1x128xf32>
    %76 = arith.addf %72, %75 : vector<1x128xf32>
    %77 = math.tanh %76 : vector<1x128xf32>
    %cst_17 = arith.constant 1.000000e+00 : f32
    %78 = vector.broadcast %cst_17 : f32 to vector<1x128xf32>
    %79 = arith.subf %78, %71 : vector<1x128xf32>
    %80 = arith.mulf %79, %77 : vector<1x128xf32>
    %81 = arith.mulf %71, %58 : vector<1x128xf32>
    %82 = arith.addf %80, %81 : vector<1x128xf32>
    %83 = vector.extract_strided_slice %7 {offsets = [3, 0], sizes = [1, 384], strides = [1, 1]} : vector<8x384xf32> to vector<1x384xf32>
    %84 = vector.extract_strided_slice %82 {offsets = [0, 0], sizes = [1, 32], strides = [1, 1]} : vector<1x128xf32> to vector<1x32xf32>
    %cst_18 = arith.constant dense<0.000000e+00> : vector<1x384xf32>
    %85 = tpu.matmul %84, %8, %cst_18 {dimension_numbers = #tpu.dot_dimension_numbers<[1], [0], [0], [1], [0, 0, 1, 1], [], []>} : vector<1x32xf32>, vector<32x384xf32>, vector<1x384xf32> -> vector<1x384xf32>
    %86 = vector.extract_strided_slice %83 {offsets = [0, 0], sizes = [1, 256], strides = [1, 1]} : vector<1x384xf32> to vector<1x256xf32>
    %87 = vector.extract_strided_slice %85 {offsets = [0, 0], sizes = [1, 256], strides = [1, 1]} : vector<1x384xf32> to vector<1x256xf32>
    %88 = arith.addf %86, %87 : vector<1x256xf32>
    %89 = arith.negf %88 : vector<1x256xf32>
    %90 = math.exp %89 : vector<1x256xf32>
    %cst_19 = arith.constant 1.000000e+00 : f32
    %91 = vector.broadcast %cst_19 : f32 to vector<1x256xf32>
    %92 = arith.addf %91, %90 : vector<1x256xf32>
    %93 = arith.divf %91, %92 : vector<1x256xf32>
    %94 = vector.extract_strided_slice %93 {offsets = [0, 0], sizes = [1, 128], strides = [1, 1]} : vector<1x256xf32> to vector<1x128xf32>
    %95 = vector.extract_strided_slice %93 {offsets = [0, 128], sizes = [1, 128], strides = [1, 1]} : vector<1x256xf32> to vector<1x128xf32>
    %96 = vector.extract_strided_slice %83 {offsets = [0, 256], sizes = [1, 128], strides = [1, 1]} : vector<1x384xf32> to vector<1x128xf32>
    %97 = vector.extract_strided_slice %85 {offsets = [0, 256], sizes = [1, 128], strides = [1, 1]} : vector<1x384xf32> to vector<1x128xf32>
    %98 = arith.addf %97, %9 : vector<1x128xf32>
    %99 = arith.mulf %94, %98 : vector<1x128xf32>
    %100 = arith.addf %96, %99 : vector<1x128xf32>
    %101 = math.tanh %100 : vector<1x128xf32>
    %cst_20 = arith.constant 1.000000e+00 : f32
    %102 = vector.broadcast %cst_20 : f32 to vector<1x128xf32>
    %103 = arith.subf %102, %95 : vector<1x128xf32>
    %104 = arith.mulf %103, %101 : vector<1x128xf32>
    %105 = arith.mulf %95, %82 : vector<1x128xf32>
    %106 = arith.addf %104, %105 : vector<1x128xf32>
    %107 = vector.extract_strided_slice %7 {offsets = [4, 0], sizes = [1, 384], strides = [1, 1]} : vector<8x384xf32> to vector<1x384xf32>
    %108 = vector.extract_strided_slice %106 {offsets = [0, 0], sizes = [1, 32], strides = [1, 1]} : vector<1x128xf32> to vector<1x32xf32>
    %cst_21 = arith.constant dense<0.000000e+00> : vector<1x384xf32>
    %109 = tpu.matmul %108, %8, %cst_21 {dimension_numbers = #tpu.dot_dimension_numbers<[1], [0], [0], [1], [0, 0, 1, 1], [], []>} : vector<1x32xf32>, vector<32x384xf32>, vector<1x384xf32> -> vector<1x384xf32>
    %110 = vector.extract_strided_slice %107 {offsets = [0, 0], sizes = [1, 256], strides = [1, 1]} : vector<1x384xf32> to vector<1x256xf32>
    %111 = vector.extract_strided_slice %109 {offsets = [0, 0], sizes = [1, 256], strides = [1, 1]} : vector<1x384xf32> to vector<1x256xf32>
    %112 = arith.addf %110, %111 : vector<1x256xf32>
    %113 = arith.negf %112 : vector<1x256xf32>
    %114 = math.exp %113 : vector<1x256xf32>
    %cst_22 = arith.constant 1.000000e+00 : f32
    %115 = vector.broadcast %cst_22 : f32 to vector<1x256xf32>
    %116 = arith.addf %115, %114 : vector<1x256xf32>
    %117 = arith.divf %115, %116 : vector<1x256xf32>
    %118 = vector.extract_strided_slice %117 {offsets = [0, 0], sizes = [1, 128], strides = [1, 1]} : vector<1x256xf32> to vector<1x128xf32>
    %119 = vector.extract_strided_slice %117 {offsets = [0, 128], sizes = [1, 128], strides = [1, 1]} : vector<1x256xf32> to vector<1x128xf32>
    %120 = vector.extract_strided_slice %107 {offsets = [0, 256], sizes = [1, 128], strides = [1, 1]} : vector<1x384xf32> to vector<1x128xf32>
    %121 = vector.extract_strided_slice %109 {offsets = [0, 256], sizes = [1, 128], strides = [1, 1]} : vector<1x384xf32> to vector<1x128xf32>
    %122 = arith.addf %121, %9 : vector<1x128xf32>
    %123 = arith.mulf %118, %122 : vector<1x128xf32>
    %124 = arith.addf %120, %123 : vector<1x128xf32>
    %125 = math.tanh %124 : vector<1x128xf32>
    %cst_23 = arith.constant 1.000000e+00 : f32
    %126 = vector.broadcast %cst_23 : f32 to vector<1x128xf32>
    %127 = arith.subf %126, %119 : vector<1x128xf32>
    %128 = arith.mulf %127, %125 : vector<1x128xf32>
    %129 = arith.mulf %119, %106 : vector<1x128xf32>
    %130 = arith.addf %128, %129 : vector<1x128xf32>
    %131 = vector.extract_strided_slice %7 {offsets = [5, 0], sizes = [1, 384], strides = [1, 1]} : vector<8x384xf32> to vector<1x384xf32>
    %132 = vector.extract_strided_slice %130 {offsets = [0, 0], sizes = [1, 32], strides = [1, 1]} : vector<1x128xf32> to vector<1x32xf32>
    %cst_24 = arith.constant dense<0.000000e+00> : vector<1x384xf32>
    %133 = tpu.matmul %132, %8, %cst_24 {dimension_numbers = #tpu.dot_dimension_numbers<[1], [0], [0], [1], [0, 0, 1, 1], [], []>} : vector<1x32xf32>, vector<32x384xf32>, vector<1x384xf32> -> vector<1x384xf32>
    %134 = vector.extract_strided_slice %131 {offsets = [0, 0], sizes = [1, 256], strides = [1, 1]} : vector<1x384xf32> to vector<1x256xf32>
    %135 = vector.extract_strided_slice %133 {offsets = [0, 0], sizes = [1, 256], strides = [1, 1]} : vector<1x384xf32> to vector<1x256xf32>
    %136 = arith.addf %134, %135 : vector<1x256xf32>
    %137 = arith.negf %136 : vector<1x256xf32>
    %138 = math.exp %137 : vector<1x256xf32>
    %cst_25 = arith.constant 1.000000e+00 : f32
    %139 = vector.broadcast %cst_25 : f32 to vector<1x256xf32>
    %140 = arith.addf %139, %138 : vector<1x256xf32>
    %141 = arith.divf %139, %140 : vector<1x256xf32>
    %142 = vector.extract_strided_slice %141 {offsets = [0, 0], sizes = [1, 128], strides = [1, 1]} : vector<1x256xf32> to vector<1x128xf32>
    %143 = vector.extract_strided_slice %141 {offsets = [0, 128], sizes = [1, 128], strides = [1, 1]} : vector<1x256xf32> to vector<1x128xf32>
    %144 = vector.extract_strided_slice %131 {offsets = [0, 256], sizes = [1, 128], strides = [1, 1]} : vector<1x384xf32> to vector<1x128xf32>
    %145 = vector.extract_strided_slice %133 {offsets = [0, 256], sizes = [1, 128], strides = [1, 1]} : vector<1x384xf32> to vector<1x128xf32>
    %146 = arith.addf %145, %9 : vector<1x128xf32>
    %147 = arith.mulf %142, %146 : vector<1x128xf32>
    %148 = arith.addf %144, %147 : vector<1x128xf32>
    %149 = math.tanh %148 : vector<1x128xf32>
    %cst_26 = arith.constant 1.000000e+00 : f32
    %150 = vector.broadcast %cst_26 : f32 to vector<1x128xf32>
    %151 = arith.subf %150, %143 : vector<1x128xf32>
    %152 = arith.mulf %151, %149 : vector<1x128xf32>
    %153 = arith.mulf %143, %130 : vector<1x128xf32>
    %154 = arith.addf %152, %153 : vector<1x128xf32>
    %155 = vector.extract_strided_slice %7 {offsets = [6, 0], sizes = [1, 384], strides = [1, 1]} : vector<8x384xf32> to vector<1x384xf32>
    %156 = vector.extract_strided_slice %154 {offsets = [0, 0], sizes = [1, 32], strides = [1, 1]} : vector<1x128xf32> to vector<1x32xf32>
    %cst_27 = arith.constant dense<0.000000e+00> : vector<1x384xf32>
    %157 = tpu.matmul %156, %8, %cst_27 {dimension_numbers = #tpu.dot_dimension_numbers<[1], [0], [0], [1], [0, 0, 1, 1], [], []>} : vector<1x32xf32>, vector<32x384xf32>, vector<1x384xf32> -> vector<1x384xf32>
    %158 = vector.extract_strided_slice %155 {offsets = [0, 0], sizes = [1, 256], strides = [1, 1]} : vector<1x384xf32> to vector<1x256xf32>
    %159 = vector.extract_strided_slice %157 {offsets = [0, 0], sizes = [1, 256], strides = [1, 1]} : vector<1x384xf32> to vector<1x256xf32>
    %160 = arith.addf %158, %159 : vector<1x256xf32>
    %161 = arith.negf %160 : vector<1x256xf32>
    %162 = math.exp %161 : vector<1x256xf32>
    %cst_28 = arith.constant 1.000000e+00 : f32
    %163 = vector.broadcast %cst_28 : f32 to vector<1x256xf32>
    %164 = arith.addf %163, %162 : vector<1x256xf32>
    %165 = arith.divf %163, %164 : vector<1x256xf32>
    %166 = vector.extract_strided_slice %165 {offsets = [0, 0], sizes = [1, 128], strides = [1, 1]} : vector<1x256xf32> to vector<1x128xf32>
    %167 = vector.extract_strided_slice %165 {offsets = [0, 128], sizes = [1, 128], strides = [1, 1]} : vector<1x256xf32> to vector<1x128xf32>
    %168 = vector.extract_strided_slice %155 {offsets = [0, 256], sizes = [1, 128], strides = [1, 1]} : vector<1x384xf32> to vector<1x128xf32>
    %169 = vector.extract_strided_slice %157 {offsets = [0, 256], sizes = [1, 128], strides = [1, 1]} : vector<1x384xf32> to vector<1x128xf32>
    %170 = arith.addf %169, %9 : vector<1x128xf32>
    %171 = arith.mulf %166, %170 : vector<1x128xf32>
    %172 = arith.addf %168, %171 : vector<1x128xf32>
    %173 = math.tanh %172 : vector<1x128xf32>
    %cst_29 = arith.constant 1.000000e+00 : f32
    %174 = vector.broadcast %cst_29 : f32 to vector<1x128xf32>
    %175 = arith.subf %174, %167 : vector<1x128xf32>
    %176 = arith.mulf %175, %173 : vector<1x128xf32>
    %177 = arith.mulf %167, %154 : vector<1x128xf32>
    %178 = arith.addf %176, %177 : vector<1x128xf32>
    %179 = vector.extract_strided_slice %7 {offsets = [7, 0], sizes = [1, 384], strides = [1, 1]} : vector<8x384xf32> to vector<1x384xf32>
    %180 = vector.extract_strided_slice %178 {offsets = [0, 0], sizes = [1, 32], strides = [1, 1]} : vector<1x128xf32> to vector<1x32xf32>
    %cst_30 = arith.constant dense<0.000000e+00> : vector<1x384xf32>
    %181 = tpu.matmul %180, %8, %cst_30 {dimension_numbers = #tpu.dot_dimension_numbers<[1], [0], [0], [1], [0, 0, 1, 1], [], []>} : vector<1x32xf32>, vector<32x384xf32>, vector<1x384xf32> -> vector<1x384xf32>
    %182 = vector.extract_strided_slice %179 {offsets = [0, 0], sizes = [1, 256], strides = [1, 1]} : vector<1x384xf32> to vector<1x256xf32>
    %183 = vector.extract_strided_slice %181 {offsets = [0, 0], sizes = [1, 256], strides = [1, 1]} : vector<1x384xf32> to vector<1x256xf32>
    %184 = arith.addf %182, %183 : vector<1x256xf32>
    %185 = arith.negf %184 : vector<1x256xf32>
    %186 = math.exp %185 : vector<1x256xf32>
    %cst_31 = arith.constant 1.000000e+00 : f32
    %187 = vector.broadcast %cst_31 : f32 to vector<1x256xf32>
    %188 = arith.addf %187, %186 : vector<1x256xf32>
    %189 = arith.divf %187, %188 : vector<1x256xf32>
    %190 = vector.extract_strided_slice %189 {offsets = [0, 0], sizes = [1, 128], strides = [1, 1]} : vector<1x256xf32> to vector<1x128xf32>
    %191 = vector.extract_strided_slice %189 {offsets = [0, 128], sizes = [1, 128], strides = [1, 1]} : vector<1x256xf32> to vector<1x128xf32>
    %192 = vector.extract_strided_slice %179 {offsets = [0, 256], sizes = [1, 128], strides = [1, 1]} : vector<1x384xf32> to vector<1x128xf32>
    %193 = vector.extract_strided_slice %181 {offsets = [0, 256], sizes = [1, 128], strides = [1, 1]} : vector<1x384xf32> to vector<1x128xf32>
    %194 = arith.addf %193, %9 : vector<1x128xf32>
    %195 = arith.mulf %190, %194 : vector<1x128xf32>
    %196 = arith.addf %192, %195 : vector<1x128xf32>
    %197 = math.tanh %196 : vector<1x128xf32>
    %cst_32 = arith.constant 1.000000e+00 : f32
    %198 = vector.broadcast %cst_32 : f32 to vector<1x128xf32>
    %199 = arith.subf %198, %191 : vector<1x128xf32>
    %200 = arith.mulf %199, %197 : vector<1x128xf32>
    %201 = arith.mulf %191, %178 : vector<1x128xf32>
    %202 = arith.addf %200, %201 : vector<1x128xf32>
    %203 = tpu.concatenate %34, %58, %82, %106, %130, %154, %178, %202 in 0 : vector<1x128xf32>, vector<1x128xf32>, vector<1x128xf32>, vector<1x128xf32>, vector<1x128xf32>, vector<1x128xf32>, vector<1x128xf32>, vector<1x128xf32> -> vector<8x128xf32>
    %c0_33 = arith.constant 0 : index
    %c0_34 = arith.constant 0 : index
    %204 = vector.load %arg6[%c0_33, %c0_34] : memref<8x128xf32, #tpu.memory_space<vmem>>, vector<8x128xf32>
    tpu.vector_store %arg6[%c0_33, %c0_34], %203 {strides = array<i32>} : memref<8x128xf32, #tpu.memory_space<vmem>>, vector<8x128xf32>,
    return
  }
  func.func @transform_0(%arg0: i32) -> (i32, i32) {
    %c0_i32 = arith.constant 0 : i32
    %c0_i32_0 = arith.constant 0 : i32
    %c0_i32_1 = arith.constant 0 : i32
    return %c0_i32, %c0_i32_0 : i32, i32
  }
  func.func @transform_1(%arg0: i32) -> (i32, i32) {
    %c0_i32 = arith.constant 0 : i32
    %c0_i32_0 = arith.constant 0 : i32
    %c0_i32_1 = arith.constant 0 : i32
    return %c0_i32, %c0_i32_0 : i32, i32
  }
  func.func @transform_2(%arg0: i32) -> (i32, i32) {
    %c0_i32 = arith.constant 0 : i32
    %c0_i32_0 = arith.constant 0 : i32
    %c0_i32_1 = arith.constant 0 : i32
    return %c0_i32, %c0_i32_0 : i32, i32
  }
  func.func @transform_3(%arg0: i32) -> (i32, i32) {
    %c0_i32 = arith.constant 0 : i32
    %c0_i32_0 = arith.constant 0 : i32
    %c0_i32_1 = arith.constant 0 : i32
    return %c0_i32, %c0_i32_0 : i32, i32
  }
  func.func @transform_4(%arg0: i32) -> (i32, i32) {
    %c0_i32 = arith.constant 0 : i32
    %c0_i32_0 = arith.constant 0 : i32
    %c0_i32_1 = arith.constant 0 : i32
    return %c0_i32, %c0_i32_0 : i32, i32
  }
  func.func @transform_5(%arg0: i32) -> (i32, i32) {
    %c0_i32 = arith.constant 0 : i32
    %c0_i32_0 = arith.constant 0 : i32
    %c0_i32_1 = arith.constant 0 : i32
    return %c0_i32, %c0_i32_0 : i32, i32
  }
}

</mosaic_0001>

<llo_original>
// kernel: encoder_rnn_forward.1
$region0: #{encoder_rnn_forward.1}
  #allocation0 [shape = 'u32[]', space=smem, size = 0x4, offset = 0x4, fixed_abs, tag = 'smem constant byte address 0x4 - core index']
  #allocation1 [shape = 'u32[144,128]{1,0:T(1,128)}', space=vmem, size = 0x12000, scoped, tag = 'internal scratch']
  %s0 = inlined_call_operand.vmem [shape: s32[8,1], index: 0, kind: input, shape index: {}]
  %s1 = inlined_call_operand.hbm [shape: f32[64,384], index: 1, kind: input, shape index: {}]
  %s2 = inlined_call_operand.hbm [shape: f32[32,384], index: 2, kind: input, shape index: {}]
  %s3 = inlined_call_operand.vmem [shape: f32[1,128], index: 3, kind: input, shape index: {}]
  %s4 = inlined_call_operand.vmem [shape: f32[1,128], index: 4, kind: input, shape index: {}]
  %s5 = inlined_call_operand.vmem [shape: f32[8,128], index: 5, kind: output, shape index: {}]
  %s6 = sld [smem:[#allocation0]]
  $region38: #{encoder_rnn_forward.1} parent=0
    _
  %s8 = ssub.s32 1, %s6
  %s9 = scalar_select 0, %s8, %s6
  $region1: #{encoder_rnn_forward.1} parent=0
    #allocation2 [shape = 'u8[98304]{0}', space=vmem, size = 0x18000, scoped, tag = 'input window, operand 1, single buffered']
    #allocation3 [shape = 's32[1]{0}', space=sflag, size = 0x4, scoped, tag = 'scoped memory for encoder_rnn_forward.1']
    #allocation4 [shape = 'u8[49152]{0}', space=vmem, size = 0xc000, scoped, tag = 'input window, operand 2, single buffered']
    #allocation5 [shape = 's32[1]{0}', space=sflag, size = 0x4, scoped, tag = 'scoped memory for encoder_rnn_forward.1']
    %10 = vsyncpa [#allocation3], 0
    %11 = vsyncpa [#allocation5], 0
    // Predicated region
    $region2: #{encoder_rnn_forward.1} parent=1 // pred_check
      _
    $region3: #{encoder_rnn_forward.1} parent=1 // pred_check_branch
      %13 = sbr.rel (0) target = $region5
    $region4: #{encoder_rnn_forward.1} parent=1 // pred_region
      _
    $region5: #{encoder_rnn_forward.1} parent=1 // pred_fallthru
      _
    // Predicated region
    $region6: #{encoder_rnn_forward.1} parent=1 // pred_check
      _
    $region7: #{encoder_rnn_forward.1} parent=1 // pred_check_branch
      %15 = sbr.rel (0) target = $region9
    $region8: #{encoder_rnn_forward.1} parent=1 // pred_region
      %s17 = ssub.s32 3072, 3072
      %18 = vsyncadd [#allocation3], %s17
      %s19 = sshll.u32 [#allocation2], 4
      %s20 = int_to_ptr.vmem [resolvable:$true] %s19
      %25 = dma.hbm_to_vmem [thread:$0]  %s1, 3072, %s20, [#allocation3], 384, 384, 24
    $region9: #{encoder_rnn_forward.1} parent=1 // pred_fallthru
      _
    // Predicated region
    $region10: #{encoder_rnn_forward.1} parent=1 // pred_check
      _
    $region11: #{encoder_rnn_forward.1} parent=1 // pred_check_branch
      %27 = sbr.rel (0) target = $region13
    $region12: #{encoder_rnn_forward.1} parent=1 // pred_region
      %s29 = ssub.s32 1536, 1536
      %30 = vsyncadd [#allocation5], %s29
      %s31 = sshll.u32 [#allocation4], 4
      %s32 = int_to_ptr.vmem [resolvable:$true] %s31
      %37 = dma.hbm_to_vmem [thread:$0]  %s2, 1536, %s32, [#allocation5], 384, 384, 24
    $region13: #{encoder_rnn_forward.1} parent=1 // pred_fallthru
      _
    // Predicated region
    $region14: #{encoder_rnn_forward.1} parent=1 // pred_check
      _
    $region15: #{encoder_rnn_forward.1} parent=1 // pred_check_branch
      %39 = sbr.rel (0) target = $region17
    $region16: #{encoder_rnn_forward.1} parent=1 // pred_region
      _
    $region17: #{encoder_rnn_forward.1} parent=1 // pred_fallthru
      _
    // Predicated region
    $region18: #{encoder_rnn_forward.1} parent=1 // pred_check
      _
    $region19: #{encoder_rnn_forward.1} parent=1 // pred_check_branch
      %41 = sbr.rel (0) target = $region21
    $region20: #{encoder_rnn_forward.1} parent=1 // pred_region
      _
    $region21: #{encoder_rnn_forward.1} parent=1 // pred_fallthru
      _
    // Predicated region
    $region22: #{encoder_rnn_forward.1} parent=1 // pred_check
      _
    $region23: #{encoder_rnn_forward.1} parent=1 // pred_check_branch
      %43 = sbr.rel (0) target = $region25
    $region24: #{encoder_rnn_forward.1} parent=1 // pred_region
      %44 = dma.done [#allocation3], 3072
    $region25: #{encoder_rnn_forward.1} parent=1 // pred_fallthru
      _
    // Predicated region
    $region26: #{encoder_rnn_forward.1} parent=1 // pred_check
      _
    $region27: #{encoder_rnn_forward.1} parent=1 // pred_check_branch
      %46 = sbr.rel (0) target = $region29
    $region28: #{encoder_rnn_forward.1} parent=1 // pred_region
      %47 = dma.done [#allocation5], 1536
    $region29: #{encoder_rnn_forward.1} parent=1 // pred_fallthru
      _
    %v48 = vld [vmem:[%s0] sm:$0xff]
    %v49 = vlaneseq
    %v50 = vand.u32 %v49, 127
    %51 = vset.pattern.permute.xlu0 0
    %52 = vperm.xlu0 %51, %v48
    %v53 = vpop.permute.xlu0 %52
    %vm54 = vcmp.eq.s32.totalorder %v50, %v53
    %v55 = vsel %vm54, 1, 0
    %v56 = vcvt.s32.f32 %v55
    %v57 = vld [vmem:[#allocation2] sm:$0xff]
    %v58 = vld [vmem:[#allocation2 + $0x8] sm:$0xff]
    %v59 = vld [vmem:[#allocation2 + $0x10] sm:$0xff]
    %v60 = vld [vmem:[#allocation2 + $0x18] sm:$0xff]
    %v61 = vld [vmem:[#allocation2 + $0x20] sm:$0xff]
    %v62 = vld [vmem:[#allocation2 + $0x28] sm:$0xff]
    %v63 = vld [vmem:[#allocation2 + $0x30] sm:$0xff]
    %v64 = vld [vmem:[#allocation2 + $0x38] sm:$0xff]
    %v65 = vld [vmem:[#allocation2 + $0x40] sm:$0xff]
    %v66 = vld [vmem:[#allocation2 + $0x48] sm:$0xff]
    %v67 = vld [vmem:[#allocation2 + $0x50] sm:$0xff]
    %v68 = vld [vmem:[#allocation2 + $0x58] sm:$0xff]
    %v69 = vld [vmem:[#allocation2 + $0x60] sm:$0xff]
    %v70 = vld [vmem:[#allocation2 + $0x68] sm:$0xff]
    %v71 = vld [vmem:[#allocation2 + $0x70] sm:$0xff]
    %v72 = vld [vmem:[#allocation2 + $0x78] sm:$0xff]
    %v73 = vld [vmem:[#allocation2 + $0x80] sm:$0xff]
    %v74 = vld [vmem:[#allocation2 + $0x88] sm:$0xff]
    %v75 = vld [vmem:[#allocation2 + $0x90] sm:$0xff]
    %v76 = vld [vmem:[#allocation2 + $0x98] sm:$0xff]
    %v77 = vld [vmem:[#allocation2 + $0xa0] sm:$0xff]
    %v78 = vld [vmem:[#allocation2 + $0xa8] sm:$0xff]
    %v79 = vld [vmem:[#allocation2 + $0xb0] sm:$0xff]
    %v80 = vld [vmem:[#allocation2 + $0xb8] sm:$0xff]
    %vm81 = vcmask 523264
    %v83 = vsel %vm81, %v56, 0
    %85 = vmatprep.subr.mxu0 0.0
    %86 = vmatpush1.msra.mxu0 0.0
    %87 = vmatprep.subr.mxu0 0.0
    %88 = vmatpush1.msra.mxu0 0.0
    %89 = vmatprep.subr.mxu0 0.0
    %90 = vmatpush1.msra.mxu0 0.0
    %91 = vmatprep.subr.mxu0 0.0
    %92 = vmatpush1.msra.mxu0 0.0
    %93 = vmatprep.subr.mxu0 0.0
    %94 = vmatpush1.msra.mxu0 0.0
    %95 = vmatprep.subr.mxu0 0.0
    %96 = vmatpush1.msra.mxu0 0.0
    %97 = vmatprep.subr.mxu0 0.0
    %98 = vmatpush1.msra.mxu0 0.0
    %99 = vmatprep.subr.mxu0 0.0
    %100 = vmatpush1.msra.mxu0 0.0
    %101 = vmatprep.subr.mxu0 %v79
    %102 = vmatpush1.msra.mxu0 %v78
    %103 = vmatprep.subr.mxu0 %v76
    %104 = vmatpush1.msra.mxu0 %v75
    %105 = vmatprep.subr.mxu0 %v73
    %106 = vmatpush1.msra.mxu0 %v72
    %107 = vmatprep.subr.mxu0 %v70
    %108 = vmatpush1.msra.mxu0 %v69
    %109 = vmatprep.subr.mxu0 %v67
    %110 = vmatpush1.msra.mxu0 %v66
    %111 = vmatprep.subr.mxu0 %v64
    %112 = vmatpush1.msra.mxu0 %v63
    %113 = vmatprep.subr.mxu0 %v61
    %114 = vmatpush1.msra.mxu0 %v60
    %115 = vmatprep.subr.mxu0 %v58
    %116 = vmatpush1.msra.mxu0 %v57
    %117 = vmatprep.subr.mxu0 0.0
    %118 = vmatpush2.msra.mxu0 0.0
    %119 = vmatprep.subr.mxu0 0.0
    %120 = vmatpush2.msra.mxu0 0.0
    %121 = vmatprep.subr.mxu0 0.0
    %122 = vmatpush2.msra.mxu0 0.0
    %123 = vmatprep.subr.mxu0 0.0
    %124 = vmatpush2.msra.mxu0 0.0
    %125 = vmatprep.subr.mxu0 0.0
    %126 = vmatpush2.msra.mxu0 0.0
    %127 = vmatprep.subr.mxu0 0.0
    %128 = vmatpush2.msra.mxu0 0.0
    %129 = vmatprep.subr.mxu0 0.0
    %130 = vmatpush2.msra.mxu0 0.0
    %131 = vmatprep.subr.mxu0 0.0
    %132 = vmatpush2.msra.mxu0 0.0
    %133 = vmatprep.subr.mxu0 0.0
    %134 = vmatpush2.msra.mxu0 0.0
    %135 = vmatprep.subr.mxu0 0.0
    %136 = vmatpush2.msra.mxu0 0.0
    %137 = vmatprep.subr.mxu0 0.0
    %138 = vmatpush2.msra.mxu0 0.0
    %139 = vmatprep.subr.mxu0 0.0
    %140 = vmatpush2.msra.mxu0 0.0
    %141 = vmatprep.subr.mxu0 0.0
    %142 = vmatpush2.msra.mxu0 0.0
    %143 = vmatprep.subr.mxu0 0.0
    %144 = vmatpush2.msra.mxu0 0.0
    %145 = vmatprep.subr.mxu0 0.0
    %146 = vmatpush2.msra.mxu0 0.0
    %147 = vmatprep.subr.mxu0 0.0
    %148 = vmatpush2.msra.mxu0 0.0
    %149 = vmatprep.mubr.f32.mxu0 0.0
    %150 = vmatmul.mubr.f32.gmra.mxu0 %v83
    %v151 = vpop.f32.mrf.mxu0
    %v152 = vadd.f32 0.0, %v151
    %v153 = vpop.f32.mrf.mxu0
    %v154 = vadd.f32 0.0, %v153
    %155 = vdwg.mxu0
    %156 = vmatprep.subr.mxu0 0.0
    %157 = vmatpush1.msra.mxu0 0.0
    %158 = vmatprep.subr.mxu0 0.0
    %159 = vmatpush1.msra.mxu0 0.0
    %160 = vmatprep.subr.mxu0 0.0
    %161 = vmatpush1.msra.mxu0 0.0
    %162 = vmatprep.subr.mxu0 0.0
    %163 = vmatpush1.msra.mxu0 0.0
    %164 = vmatprep.subr.mxu0 0.0
    %165 = vmatpush1.msra.mxu0 0.0
    %166 = vmatprep.subr.mxu0 0.0
    %167 = vmatpush1.msra.mxu0 0.0
    %168 = vmatprep.subr.mxu0 0.0
    %169 = vmatpush1.msra.mxu0 0.0
    %170 = vmatprep.subr.mxu0 0.0
    %171 = vmatpush1.msra.mxu0 0.0
    %172 = vmatprep.subr.mxu0 0.0
    %173 = vmatpush1.msra.mxu0 %v80
    %174 = vmatprep.subr.mxu0 0.0
    %175 = vmatpush1.msra.mxu0 %v77
    %176 = vmatprep.subr.mxu0 0.0
    %177 = vmatpush1.msra.mxu0 %v74
    %178 = vmatprep.subr.mxu0 0.0
    %179 = vmatpush1.msra.mxu0 %v71
    %180 = vmatprep.subr.mxu0 0.0
    %181 = vmatpush1.msra.mxu0 %v68
    %182 = vmatprep.subr.mxu0 0.0
    %183 = vmatpush1.msra.mxu0 %v65
    %184 = vmatprep.subr.mxu0 0.0
    %185 = vmatpush1.msra.mxu0 %v62
    %186 = vmatprep.subr.mxu0 0.0
    %187 = vmatpush1.msra.mxu0 %v59
    %188 = vmatprep.subr.mxu0 0.0
    %189 = vmatpush2.msra.mxu0 0.0
    %190 = vmatprep.subr.mxu0 0.0
    %191 = vmatpush2.msra.mxu0 0.0
    %192 = vmatprep.subr.mxu0 0.0
    %193 = vmatpush2.msra.mxu0 0.0
    %194 = vmatprep.subr.mxu0 0.0
    %195 = vmatpush2.msra.mxu0 0.0
    %196 = vmatprep.subr.mxu0 0.0
    %197 = vmatpush2.msra.mxu0 0.0
    %198 = vmatprep.subr.mxu0 0.0
    %199 = vmatpush2.msra.mxu0 0.0
    %200 = vmatprep.subr.mxu0 0.0
    %201 = vmatpush2.msra.mxu0 0.0
    %202 = vmatprep.subr.mxu0 0.0
    %203 = vmatpush2.msra.mxu0 0.0
    %204 = vmatprep.subr.mxu0 0.0
    %205 = vmatpush2.msra.mxu0 0.0
    %206 = vmatprep.subr.mxu0 0.0
    %207 = vmatpush2.msra.mxu0 0.0
    %208 = vmatprep.subr.mxu0 0.0
    %209 = vmatpush2.msra.mxu0 0.0
    %210 = vmatprep.subr.mxu0 0.0
    %211 = vmatpush2.msra.mxu0 0.0
    %212 = vmatprep.subr.mxu0 0.0
    %213 = vmatpush2.msra.mxu0 0.0
    %214 = vmatprep.subr.mxu0 0.0
    %215 = vmatpush2.msra.mxu0 0.0
    %216 = vmatprep.subr.mxu0 0.0
    %217 = vmatpush2.msra.mxu0 0.0
    %218 = vmatprep.subr.mxu0 0.0
    %219 = vmatpush2.msra.mxu0 0.0
    %220 = vmatprep.mubr.f32.mxu0 0.0
    %221 = vmatmul.mubr.f32.gmra.mxu0 %v83
    %v222 = vpop.f32.mrf.mxu0
    %v223 = vadd.f32 0.0, %v222
    %v224 = vpop.f32.mrf.mxu0
    %225 = vdwg.mxu0
    %v226 = vld [vmem:[#allocation4] sm:$0xff]
    %v227 = vld [vmem:[#allocation4 + $0x8] sm:$0xff]
    %v228 = vld [vmem:[#allocation4 + $0x10] sm:$0xff]
    %v229 = vld [vmem:[#allocation4 + $0x18] sm:$0xff]
    %v230 = vld [vmem:[#allocation4 + $0x20] sm:$0xff]
    %v231 = vld [vmem:[#allocation4 + $0x28] sm:$0xff]
    %v232 = vld [vmem:[#allocation4 + $0x30] sm:$0xff]
    %v233 = vld [vmem:[#allocation4 + $0x38] sm:$0xff]
    %v234 = vld [vmem:[#allocation4 + $0x40] sm:$0xff]
    %v235 = vld [vmem:[#allocation4 + $0x48] sm:$0xff]
    %v236 = vld [vmem:[#allocation4 + $0x50] sm:$0xff]
    %v237 = vld [vmem:[#allocation4 + $0x58] sm:$0xff]
    %v238 = vld [vmem:[%s3] sm:$0x1]
    %v239 = vld [vmem:[%s4] sm:$0x1]
    %vm240 = vcmask 261120
    %v242 = vsel %vm240, %v239, 0
    %244 = vmatprep.subr.mxu0 0.0
    %245 = vmatpush1.msra.mxu0 0.0
    %246 = vmatprep.subr.mxu0 0.0
    %247 = vmatpush1.msra.mxu0 0.0
    %248 = vmatprep.subr.mxu0 0.0
    %249 = vmatpush1.msra.mxu0 0.0
    %250 = vmatprep.subr.mxu0 0.0
    %251 = vmatpush1.msra.mxu0 0.0
    %252 = vmatprep.subr.mxu0 0.0
    %253 = vmatpush1.msra.mxu0 0.0
    %254 = vmatprep.subr.mxu0 0.0
    %255 = vmatpush1.msra.mxu0 0.0
    %256 = vmatprep.subr.mxu0 0.0
    %257 = vmatpush1.msra.mxu0 0.0
    %258 = vmatprep.subr.mxu0 0.0
    %259 = vmatpush1.msra.mxu0 0.0
    %260 = vmatprep.subr.mxu0 0.0
    %261 = vmatpush1.msra.mxu0 0.0
    %262 = vmatprep.subr.mxu0 0.0
    %263 = vmatpush1.msra.mxu0 0.0
    %264 = vmatprep.subr.mxu0 0.0
    %265 = vmatpush1.msra.mxu0 0.0
    %266 = vmatprep.subr.mxu0 0.0
    %267 = vmatpush1.msra.mxu0 0.0
    %268 = vmatprep.subr.mxu0 %v236
    %269 = vmatpush1.msra.mxu0 %v235
    %270 = vmatprep.subr.mxu0 %v233
    %271 = vmatpush1.msra.mxu0 %v232
    %272 = vmatprep.subr.mxu0 %v230
    %273 = vmatpush1.msra.mxu0 %v229
    %274 = vmatprep.subr.mxu0 %v227
    %275 = vmatpush1.msra.mxu0 %v226
    %276 = vmatprep.subr.mxu0 0.0
    %277 = vmatpush2.msra.mxu0 0.0
    %278 = vmatprep.subr.mxu0 0.0
    %279 = vmatpush2.msra.mxu0 0.0
    %280 = vmatprep.subr.mxu0 0.0
    %281 = vmatpush2.msra.mxu0 0.0
    %282 = vmatprep.subr.mxu0 0.0
    %283 = vmatpush2.msra.mxu0 0.0
    %284 = vmatprep.subr.mxu0 0.0
    %285 = vmatpush2.msra.mxu0 0.0
    %286 = vmatprep.subr.mxu0 0.0
    %287 = vmatpush2.msra.mxu0 0.0
    %288 = vmatprep.subr.mxu0 0.0
    %289 = vmatpush2.msra.mxu0 0.0
    %290 = vmatprep.subr.mxu0 0.0
    %291 = vmatpush2.msra.mxu0 0.0
    %292 = vmatprep.subr.mxu0 0.0
    %293 = vmatpush2.msra.mxu0 0.0
    %294 = vmatprep.subr.mxu0 0.0
    %295 = vmatpush2.msra.mxu0 0.0
    %296 = vmatprep.subr.mxu0 0.0
    %297 = vmatpush2.msra.mxu0 0.0
    %298 = vmatprep.subr.mxu0 0.0
    %299 = vmatpush2.msra.mxu0 0.0
    %300 = vmatprep.subr.mxu0 0.0
    %301 = vmatpush2.msra.mxu0 0.0
    %302 = vmatprep.subr.mxu0 0.0
    %303 = vmatpush2.msra.mxu0 0.0
    %304 = vmatprep.subr.mxu0 0.0
    %305 = vmatpush2.msra.mxu0 0.0
    %306 = vmatprep.subr.mxu0 0.0
    %307 = vmatpush2.msra.mxu0 0.0
    %308 = vmatprep.mubr.f32.mxu0 0.0
    %309 = vmatmul.mubr.f32.gmra.mxu0 %v242
    %v310 = vpop.f32.mrf.mxu0
    %v311 = vadd.f32 0.0, %v310
    %v312 = vpop.f32.mrf.mxu0
    %v313 = vadd.f32 0.0, %v312
    %314 = vdwg.mxu0
    %315 = vmatprep.subr.mxu0 0.0
    %316 = vmatpush1.msra.mxu0 0.0
    %317 = vmatprep.subr.mxu0 0.0
    %318 = vmatpush1.msra.mxu0 0.0
    %319 = vmatprep.subr.mxu0 0.0
    %320 = vmatpush1.msra.mxu0 0.0
    %321 = vmatprep.subr.mxu0 0.0
    %322 = vmatpush1.msra.mxu0 0.0
    %323 = vmatprep.subr.mxu0 0.0
    %324 = vmatpush1.msra.mxu0 0.0
    %325 = vmatprep.subr.mxu0 0.0
    %326 = vmatpush1.msra.mxu0 0.0
    %327 = vmatprep.subr.mxu0 0.0
    %328 = vmatpush1.msra.mxu0 0.0
    %329 = vmatprep.subr.mxu0 0.0
    %330 = vmatpush1.msra.mxu0 0.0
    %331 = vmatprep.subr.mxu0 0.0
    %332 = vmatpush1.msra.mxu0 0.0
    %333 = vmatprep.subr.mxu0 0.0
    %334 = vmatpush1.msra.mxu0 0.0
    %335 = vmatprep.subr.mxu0 0.0
    %336 = vmatpush1.msra.mxu0 0.0
    %337 = vmatprep.subr.mxu0 0.0
    %338 = vmatpush1.msra.mxu0 0.0
    %339 = vmatprep.subr.mxu0 0.0
    %340 = vmatpush1.msra.mxu0 %v237
    %341 = vmatprep.subr.mxu0 0.0
    %342 = vmatpush1.msra.mxu0 %v234
    %343 = vmatprep.subr.mxu0 0.0
    %344 = vmatpush1.msra.mxu0 %v231
    %345 = vmatprep.subr.mxu0 0.0
    %346 = vmatpush1.msra.mxu0 %v228
    %347 = vmatprep.subr.mxu0 0.0
    %348 = vmatpush2.msra.mxu0 0.0
    %349 = vmatprep.subr.mxu0 0.0
    %350 = vmatpush2.msra.mxu0 0.0
    %351 = vmatprep.subr.mxu0 0.0
    %352 = vmatpush2.msra.mxu0 0.0
    %353 = vmatprep.subr.mxu0 0.0
    %354 = vmatpush2.msra.mxu0 0.0
    %355 = vmatprep.subr.mxu0 0.0
    %356 = vmatpush2.msra.mxu0 0.0
    %357 = vmatprep.subr.mxu0 0.0
    %358 = vmatpush2.msra.mxu0 0.0
    %359 = vmatprep.subr.mxu0 0.0
    %360 = vmatpush2.msra.mxu0 0.0
    %361 = vmatprep.subr.mxu0 0.0
    %362 = vmatpush2.msra.mxu0 0.0
    %363 = vmatprep.subr.mxu0 0.0
    %364 = vmatpush2.msra.mxu0 0.0
    %365 = vmatprep.subr.mxu0 0.0
    %366 = vmatpush2.msra.mxu0 0.0
    %367 = vmatprep.subr.mxu0 0.0
    %368 = vmatpush2.msra.mxu0 0.0
    %369 = vmatprep.subr.mxu0 0.0
    %370 = vmatpush2.msra.mxu0 0.0
    %371 = vmatprep.subr.mxu0 0.0
    %372 = vmatpush2.msra.mxu0 0.0
    %373 = vmatprep.subr.mxu0 0.0
    %374 = vmatpush2.msra.mxu0 0.0
    %375 = vmatprep.subr.mxu0 0.0
    %376 = vmatpush2.msra.mxu0 0.0
    %377 = vmatprep.subr.mxu0 0.0
    %378 = vmatpush2.msra.mxu0 0.0
    %379 = vmatprep.mubr.f32.mxu0 0.0
    %380 = vmatmul.mubr.f32.gmra.mxu0 %v242
    %v381 = vpop.f32.mrf.mxu0
    %v382 = vadd.f32 0.0, %v381
    %v383 = vpop.f32.mrf.mxu0
    %384 = vdwg.mxu0
    %v385 = vadd.f32 %v152, %v311
    %v386 = vadd.f32 %v154, %v313
    %v387 = vxor.u32 %v385, 2147483648
    %v388 = vxor.u32 %v386, 2147483648
    %v389 = vmul.f32 %v387, 1.442695
    %v390 = vpow.pop %v389
    %v391 = vmul.f32 %v388, 1.442695
    %v392 = vpow.pop %v391
    %v393 = vadd.f32 %v390, 1.0
    %v394 = vadd.f32 %v392, 1.0
    %v395 = vrcp.pop %v393
    %v396 = vmul.f32 1.0, %v395
    %v397 = vrcp.pop %v394
    %v398 = vmul.f32 1.0, %v397
    %v399 = vadd.f32 %v382, %v238
    %v400 = vmul.f32 %v396, %v399
    %v401 = vadd.f32 %v223, %v400
    %v402 = vtanh.pop %v401
    %v403 = vsub.f32 1.0, %v398
    %v404 = vmul.f32 %v403, %v402
    %v405 = vmul.f32 %v398, %v239
    %v406 = vadd.f32 %v404, %v405
    %v408 = vsel %vm240, %v406, 0
    %410 = vmatprep.subr.mxu0 0.0
    %411 = vmatpush1.msra.mxu0 0.0
    %412 = vmatprep.subr.mxu0 0.0
    %413 = vmatpush1.msra.mxu0 0.0
    %414 = vmatprep.subr.mxu0 0.0
    %415 = vmatpush1.msra.mxu0 0.0
    %416 = vmatprep.subr.mxu0 0.0
    %417 = vmatpush1.msra.mxu0 0.0
    %418 = vmatprep.subr.mxu0 0.0
    %419 = vmatpush1.msra.mxu0 0.0
    %420 = vmatprep.subr.mxu0 0.0
    %421 = vmatpush1.msra.mxu0 0.0
    %422 = vmatprep.subr.mxu0 0.0
    %423 = vmatpush1.msra.mxu0 0.0
    %424 = vmatprep.subr.mxu0 0.0
    %425 = vmatpush1.msra.mxu0 0.0
    %426 = vmatprep.subr.mxu0 0.0
    %427 = vmatpush1.msra.mxu0 0.0
    %428 = vmatprep.subr.mxu0 0.0
    %429 = vmatpush1.msra.mxu0 0.0
    %430 = vmatprep.subr.mxu0 0.0
    %431 = vmatpush1.msra.mxu0 0.0
    %432 = vmatprep.subr.mxu0 0.0
    %433 = vmatpush1.msra.mxu0 0.0
    %434 = vmatprep.subr.mxu0 %v236
    %435 = vmatpush1.msra.mxu0 %v235
    %436 = vmatprep.subr.mxu0 %v233
    %437 = vmatpush1.msra.mxu0 %v232
    %438 = vmatprep.subr.mxu0 %v230
    %439 = vmatpush1.msra.mxu0 %v229
    %440 = vmatprep.subr.mxu0 %v227
    %441 = vmatpush1.msra.mxu0 %v226
    %442 = vmatprep.subr.mxu0 0.0
    %443 = vmatpush2.msra.mxu0 0.0
    %444 = vmatprep.subr.mxu0 0.0
    %445 = vmatpush2.msra.mxu0 0.0
    %446 = vmatprep.subr.mxu0 0.0
    %447 = vmatpush2.msra.mxu0 0.0
    %448 = vmatprep.subr.mxu0 0.0
    %449 = vmatpush2.msra.mxu0 0.0
    %450 = vmatprep.subr.mxu0 0.0
    %451 = vmatpush2.msra.mxu0 0.0
    %452 = vmatprep.subr.mxu0 0.0
    %453 = vmatpush2.msra.mxu0 0.0
    %454 = vmatprep.subr.mxu0 0.0
    %455 = vmatpush2.msra.mxu0 0.0
    %456 = vmatprep.subr.mxu0 0.0
    %457 = vmatpush2.msra.mxu0 0.0
    %458 = vmatprep.subr.mxu0 0.0
    %459 = vmatpush2.msra.mxu0 0.0
    %460 = vmatprep.subr.mxu0 0.0
    %461 = vmatpush2.msra.mxu0 0.0
    %462 = vmatprep.subr.mxu0 0.0
    %463 = vmatpush2.msra.mxu0 0.0
    %464 = vmatprep.subr.mxu0 0.0
    %465 = vmatpush2.msra.mxu0 0.0
    %466 = vmatprep.subr.mxu0 0.0
    %467 = vmatpush2.msra.mxu0 0.0
    %468 = vmatprep.subr.mxu0 0.0
    %469 = vmatpush2.msra.mxu0 0.0
    %470 = vmatprep.subr.mxu0 0.0
    %471 = vmatpush2.msra.mxu0 0.0
    %472 = vmatprep.subr.mxu0 0.0
    %473 = vmatpush2.msra.mxu0 0.0
    %474 = vmatprep.mubr.f32.mxu0 0.0
    %475 = vmatmul.mubr.f32.gmra.mxu0 %v408
    %v476 = vpop.f32.mrf.mxu0
    %v477 = vadd.f32 0.0, %v476
    %v478 = vpop.f32.mrf.mxu0
    %v479 = vadd.f32 0.0, %v478
    %480 = vdwg.mxu0
    %481 = vmatprep.subr.mxu0 0.0
    %482 = vmatpush1.msra.mxu0 0.0
    %483 = vmatprep.subr.mxu0 0.0
    %484 = vmatpush1.msra.mxu0 0.0
    %485 = vmatprep.subr.mxu0 0.0
    %486 = vmatpush1.msra.mxu0 0.0
    %487 = vmatprep.subr.mxu0 0.0
    %488 = vmatpush1.msra.mxu0 0.0
    %489 = vmatprep.subr.mxu0 0.0
    %490 = vmatpush1.msra.mxu0 0.0
    %491 = vmatprep.subr.mxu0 0.0
    %492 = vmatpush1.msra.mxu0 0.0
    %493 = vmatprep.subr.mxu0 0.0
    %494 = vmatpush1.msra.mxu0 0.0
    %495 = vmatprep.subr.mxu0 0.0
    %496 = vmatpush1.msra.mxu0 0.0
    %497 = vmatprep.subr.mxu0 0.0
    %498 = vmatpush1.msra.mxu0 0.0
    %499 = vmatprep.subr.mxu0 0.0
    %500 = vmatpush1.msra.mxu0 0.0
    %501 = vmatprep.subr.mxu0 0.0
    %502 = vmatpush1.msra.mxu0 0.0
    %503 = vmatprep.subr.mxu0 0.0
    %504 = vmatpush1.msra.mxu0 0.0
    %505 = vmatprep.subr.mxu0 0.0
    %506 = vmatpush1.msra.mxu0 %v237
    %507 = vmatprep.subr.mxu0 0.0
    %508 = vmatpush1.msra.mxu0 %v234
    %509 = vmatprep.subr.mxu0 0.0
    %510 = vmatpush1.msra.mxu0 %v231
    %511 = vmatprep.subr.mxu0 0.0
    %512 = vmatpush1.msra.mxu0 %v228
    %513 = vmatprep.subr.mxu0 0.0
    %514 = vmatpush2.msra.mxu0 0.0
    %515 = vmatprep.subr.mxu0 0.0
    %516 = vmatpush2.msra.mxu0 0.0
    %517 = vmatprep.subr.mxu0 0.0
    %518 = vmatpush2.msra.mxu0 0.0
    %519 = vmatprep.subr.mxu0 0.0
    %520 = vmatpush2.msra.mxu0 0.0
    %521 = vmatprep.subr.mxu0 0.0
    %522 = vmatpush2.msra.mxu0 0.0
    %523 = vmatprep.subr.mxu0 0.0
    %524 = vmatpush2.msra.mxu0 0.0
    %525 = vmatprep.subr.mxu0 0.0
    %526 = vmatpush2.msra.mxu0 0.0
    %527 = vmatprep.subr.mxu0 0.0
    %528 = vmatpush2.msra.mxu0 0.0
    %529 = vmatprep.subr.mxu0 0.0
    %530 = vmatpush2.msra.mxu0 0.0
    %531 = vmatprep.subr.mxu0 0.0
    %532 = vmatpush2.msra.mxu0 0.0
    %533 = vmatprep.subr.mxu0 0.0
    %534 = vmatpush2.msra.mxu0 0.0
    %535 = vmatprep.subr.mxu0 0.0
    %536 = vmatpush2.msra.mxu0 0.0
    %537 = vmatprep.subr.mxu0 0.0
    %538 = vmatpush2.msra.mxu0 0.0
    %539 = vmatprep.subr.mxu0 0.0
    %540 = vmatpush2.msra.mxu0 0.0
    %541 = vmatprep.subr.mxu0 0.0
    %542 = vmatpush2.msra.mxu0 0.0
    %543 = vmatprep.subr.mxu0 0.0
    %544 = vmatpush2.msra.mxu0 0.0
    %545 = vmatprep.mubr.f32.mxu0 0.0
    %546 = vmatmul.mubr.f32.gmra.mxu0 %v408
    %v547 = vpop.f32.mrf.mxu0
    %v548 = vadd.f32 0.0, %v547
    %v549 = vpop.f32.mrf.mxu0
    %550 = vdwg.mxu0
    %v553 = vrot.slane %v477, 7
    %v554 = vrot.slane %v479, 7
    %v557 = vadd.f32 %v152, %v553
    %v558 = vadd.f32 %v154, %v554
    %v559 = vxor.u32 %v557, 2147483648
    %v560 = vxor.u32 %v558, 2147483648
    %v561 = vmul.f32 %v559, 1.442695
    %v562 = vpow.pop %v561
    %v563 = vmul.f32 %v560, 1.442695
    %v564 = vpow.pop %v563
    %v565 = vadd.f32 %v562, 1.0
    %v566 = vadd.f32 %v564, 1.0
    %v567 = vrcp.pop %v565
    %v568 = vmul.f32 1.0, %v567
    %v569 = vrcp.pop %v566
    %v570 = vmul.f32 1.0, %v569
    %v571 = vadd.f32 %v548, %v238
    %v573 = vrot.slane %v571, 7
    %v575 = vmul.f32 %v568, %v573
    %v576 = vadd.f32 %v223, %v575
    %v577 = vtanh.pop %v576
    %v578 = vsub.f32 1.0, %v570
    %v579 = vmul.f32 %v578, %v577
    %v580 = vrot.slane %v406, 7
    %v582 = vmul.f32 %v570, %v580
    %v583 = vadd.f32 %v579, %v582
    %v585 = vrot.slane %v583, 1
    %v586 = vsel %vm240, %v585, 0
    %588 = vmatprep.subr.mxu0 0.0
    %589 = vmatpush1.msra.mxu0 0.0
    %590 = vmatprep.subr.mxu0 0.0
    %591 = vmatpush1.msra.mxu0 0.0
    %592 = vmatprep.subr.mxu0 0.0
    %593 = vmatpush1.msra.mxu0 0.0
    %594 = vmatprep.subr.mxu0 0.0
    %595 = vmatpush1.msra.mxu0 0.0
    %596 = vmatprep.subr.mxu0 0.0
    %597 = vmatpush1.msra.mxu0 0.0
    %598 = vmatprep.subr.mxu0 0.0
    %599 = vmatpush1.msra.mxu0 0.0
    %600 = vmatprep.subr.mxu0 0.0
    %601 = vmatpush1.msra.mxu0 0.0
    %602 = vmatprep.subr.mxu0 0.0
    %603 = vmatpush1.msra.mxu0 0.0
    %604 = vmatprep.subr.mxu0 0.0
    %605 = vmatpush1.msra.mxu0 0.0
    %606 = vmatprep.subr.mxu0 0.0
    %607 = vmatpush1.msra.mxu0 0.0
    %608 = vmatprep.subr.mxu0 0.0
    %609 = vmatpush1.msra.mxu0 0.0
    %610 = vmatprep.subr.mxu0 0.0
    %611 = vmatpush1.msra.mxu0 0.0
    %612 = vmatprep.subr.mxu0 %v236
    %613 = vmatpush1.msra.mxu0 %v235
    %614 = vmatprep.subr.mxu0 %v233
    %615 = vmatpush1.msra.mxu0 %v232
    %616 = vmatprep.subr.mxu0 %v230
    %617 = vmatpush1.msra.mxu0 %v229
    %618 = vmatprep.subr.mxu0 %v227
    %619 = vmatpush1.msra.mxu0 %v226
    %620 = vmatprep.subr.mxu0 0.0
    %621 = vmatpush2.msra.mxu0 0.0
    %622 = vmatprep.subr.mxu0 0.0
    %623 = vmatpush2.msra.mxu0 0.0
    %624 = vmatprep.subr.mxu0 0.0
    %625 = vmatpush2.msra.mxu0 0.0
    %626 = vmatprep.subr.mxu0 0.0
    %627 = vmatpush2.msra.mxu0 0.0
    %628 = vmatprep.subr.mxu0 0.0
    %629 = vmatpush2.msra.mxu0 0.0
    %630 = vmatprep.subr.mxu0 0.0
    %631 = vmatpush2.msra.mxu0 0.0
    %632 = vmatprep.subr.mxu0 0.0
    %633 = vmatpush2.msra.mxu0 0.0
    %634 = vmatprep.subr.mxu0 0.0
    %635 = vmatpush2.msra.mxu0 0.0
    %636 = vmatprep.subr.mxu0 0.0
    %637 = vmatpush2.msra.mxu0 0.0
    %638 = vmatprep.subr.mxu0 0.0
    %639 = vmatpush2.msra.mxu0 0.0
    %640 = vmatprep.subr.mxu0 0.0
    %641 = vmatpush2.msra.mxu0 0.0
    %642 = vmatprep.subr.mxu0 0.0
    %643 = vmatpush2.msra.mxu0 0.0
    %644 = vmatprep.subr.mxu0 0.0
    %645 = vmatpush2.msra.mxu0 0.0
    %646 = vmatprep.subr.mxu0 0.0
    %647 = vmatpush2.msra.mxu0 0.0
    %648 = vmatprep.subr.mxu0 0.0
    %649 = vmatpush2.msra.mxu0 0.0
    %650 = vmatprep.subr.mxu0 0.0
    %651 = vmatpush2.msra.mxu0 0.0
    %652 = vmatprep.mubr.f32.mxu0 0.0
    %653 = vmatmul.mubr.f32.gmra.mxu0 %v586
    %v654 = vpop.f32.mrf.mxu0
    %v655 = vadd.f32 0.0, %v654
    %v656 = vpop.f32.mrf.mxu0
    %v657 = vadd.f32 0.0, %v656
    %658 = vdwg.mxu0
    %659 = vmatprep.subr.mxu0 0.0
    %660 = vmatpush1.msra.mxu0 0.0
    %661 = vmatprep.subr.mxu0 0.0
    %662 = vmatpush1.msra.mxu0 0.0
    %663 = vmatprep.subr.mxu0 0.0
    %664 = vmatpush1.msra.mxu0 0.0
    %665 = vmatprep.subr.mxu0 0.0
    %666 = vmatpush1.msra.mxu0 0.0
    %667 = vmatprep.subr.mxu0 0.0
    %668 = vmatpush1.msra.mxu0 0.0
    %669 = vmatprep.subr.mxu0 0.0
    %670 = vmatpush1.msra.mxu0 0.0
    %671 = vmatprep.subr.mxu0 0.0
    %672 = vmatpush1.msra.mxu0 0.0
    %673 = vmatprep.subr.mxu0 0.0
    %674 = vmatpush1.msra.mxu0 0.0
    %675 = vmatprep.subr.mxu0 0.0
    %676 = vmatpush1.msra.mxu0 0.0
    %677 = vmatprep.subr.mxu0 0.0
    %678 = vmatpush1.msra.mxu0 0.0
    %679 = vmatprep.subr.mxu0 0.0
    %680 = vmatpush1.msra.mxu0 0.0
    %681 = vmatprep.subr.mxu0 0.0
    %682 = vmatpush1.msra.mxu0 0.0
    %683 = vmatprep.subr.mxu0 0.0
    %684 = vmatpush1.msra.mxu0 %v237
    %685 = vmatprep.subr.mxu0 0.0
    %686 = vmatpush1.msra.mxu0 %v234
    %687 = vmatprep.subr.mxu0 0.0
    %688 = vmatpush1.msra.mxu0 %v231
    %689 = vmatprep.subr.mxu0 0.0
    %690 = vmatpush1.msra.mxu0 %v228
    %691 = vmatprep.subr.mxu0 0.0
    %692 = vmatpush2.msra.mxu0 0.0
    %693 = vmatprep.subr.mxu0 0.0
    %694 = vmatpush2.msra.mxu0 0.0
    %695 = vmatprep.subr.mxu0 0.0
    %696 = vmatpush2.msra.mxu0 0.0
    %697 = vmatprep.subr.mxu0 0.0
    %698 = vmatpush2.msra.mxu0 0.0
    %699 = vmatprep.subr.mxu0 0.0
    %700 = vmatpush2.msra.mxu0 0.0
    %701 = vmatprep.subr.mxu0 0.0
    %702 = vmatpush2.msra.mxu0 0.0
    %703 = vmatprep.subr.mxu0 0.0
    %704 = vmatpush2.msra.mxu0 0.0
    %705 = vmatprep.subr.mxu0 0.0
    %706 = vmatpush2.msra.mxu0 0.0
    %707 = vmatprep.subr.mxu0 0.0
    %708 = vmatpush2.msra.mxu0 0.0
    %709 = vmatprep.subr.mxu0 0.0
    %710 = vmatpush2.msra.mxu0 0.0
    %711 = vmatprep.subr.mxu0 0.0
    %712 = vmatpush2.msra.mxu0 0.0
    %713 = vmatprep.subr.mxu0 0.0
    %714 = vmatpush2.msra.mxu0 0.0
    %715 = vmatprep.subr.mxu0 0.0
    %716 = vmatpush2.msra.mxu0 0.0
    %717 = vmatprep.subr.mxu0 0.0
    %718 = vmatpush2.msra.mxu0 0.0
    %719 = vmatprep.subr.mxu0 0.0
    %720 = vmatpush2.msra.mxu0 0.0
    %721 = vmatprep.subr.mxu0 0.0
    %722 = vmatpush2.msra.mxu0 0.0
    %723 = vmatprep.mubr.f32.mxu0 0.0
    %724 = vmatmul.mubr.f32.gmra.mxu0 %v586
    %v725 = vpop.f32.mrf.mxu0
    %v726 = vadd.f32 0.0, %v725
    %v727 = vpop.f32.mrf.mxu0
    %728 = vdwg.mxu0
    %v731 = vrot.slane %v655, 6
    %v732 = vrot.slane %v657, 6
    %v735 = vadd.f32 %v152, %v731
    %v736 = vadd.f32 %v154, %v732
    %v737 = vxor.u32 %v735, 2147483648
    %v738 = vxor.u32 %v736, 2147483648
    %v739 = vmul.f32 %v737, 1.442695
    %v740 = vpow.pop %v739
    %v741 = vmul.f32 %v738, 1.442695
    %v742 = vpow.pop %v741
    %v743 = vadd.f32 %v740, 1.0
    %v744 = vadd.f32 %v742, 1.0
    %v745 = vrcp.pop %v743
    %v746 = vmul.f32 1.0, %v745
    %v747 = vrcp.pop %v744
    %v748 = vmul.f32 1.0, %v747
    %v749 = vadd.f32 %v726, %v238
    %v751 = vrot.slane %v749, 6
    %v753 = vmul.f32 %v746, %v751
    %v754 = vadd.f32 %v223, %v753
    %v755 = vtanh.pop %v754
    %v756 = vsub.f32 1.0, %v748
    %v757 = vmul.f32 %v756, %v755
    %v758 = vrot.slane %v583, 7
    %v760 = vmul.f32 %v748, %v758
    %v761 = vadd.f32 %v757, %v760
    %v763 = vrot.slane %v761, 2
    %v764 = vsel %vm240, %v763, 0
    %766 = vmatprep.subr.mxu0 0.0
    %767 = vmatpush1.msra.mxu0 0.0
    %768 = vmatprep.subr.mxu0 0.0
    %769 = vmatpush1.msra.mxu0 0.0
    %770 = vmatprep.subr.mxu0 0.0
    %771 = vmatpush1.msra.mxu0 0.0
    %772 = vmatprep.subr.mxu0 0.0
    %773 = vmatpush1.msra.mxu0 0.0
    %774 = vmatprep.subr.mxu0 0.0
    %775 = vmatpush1.msra.mxu0 0.0
    %776 = vmatprep.subr.mxu0 0.0
    %777 = vmatpush1.msra.mxu0 0.0
    %778 = vmatprep.subr.mxu0 0.0
    %779 = vmatpush1.msra.mxu0 0.0
    %780 = vmatprep.subr.mxu0 0.0
    %781 = vmatpush1.msra.mxu0 0.0
    %782 = vmatprep.subr.mxu0 0.0
    %783 = vmatpush1.msra.mxu0 0.0
    %784 = vmatprep.subr.mxu0 0.0
    %785 = vmatpush1.msra.mxu0 0.0
    %786 = vmatprep.subr.mxu0 0.0
    %787 = vmatpush1.msra.mxu0 0.0
    %788 = vmatprep.subr.mxu0 0.0
    %789 = vmatpush1.msra.mxu0 0.0
    %790 = vmatprep.subr.mxu0 %v236
    %791 = vmatpush1.msra.mxu0 %v235
    %792 = vmatprep.subr.mxu0 %v233
    %793 = vmatpush1.msra.mxu0 %v232
    %794 = vmatprep.subr.mxu0 %v230
    %795 = vmatpush1.msra.mxu0 %v229
    %796 = vmatprep.subr.mxu0 %v227
    %797 = vmatpush1.msra.mxu0 %v226
    %798 = vmatprep.subr.mxu0 0.0
    %799 = vmatpush2.msra.mxu0 0.0
    %800 = vmatprep.subr.mxu0 0.0
    %801 = vmatpush2.msra.mxu0 0.0
    %802 = vmatprep.subr.mxu0 0.0
    %803 = vmatpush2.msra.mxu0 0.0
    %804 = vmatprep.subr.mxu0 0.0
    %805 = vmatpush2.msra.mxu0 0.0
    %806 = vmatprep.subr.mxu0 0.0
    %807 = vmatpush2.msra.mxu0 0.0
    %808 = vmatprep.subr.mxu0 0.0
    %809 = vmatpush2.msra.mxu0 0.0
    %810 = vmatprep.subr.mxu0 0.0
    %811 = vmatpush2.msra.mxu0 0.0
    %812 = vmatprep.subr.mxu0 0.0
    %813 = vmatpush2.msra.mxu0 0.0
    %814 = vmatprep.subr.mxu0 0.0
    %815 = vmatpush2.msra.mxu0 0.0
    %816 = vmatprep.subr.mxu0 0.0
    %817 = vmatpush2.msra.mxu0 0.0
    %818 = vmatprep.subr.mxu0 0.0
    %819 = vmatpush2.msra.mxu0 0.0
    %820 = vmatprep.subr.mxu0 0.0
    %821 = vmatpush2.msra.mxu0 0.0
    %822 = vmatprep.subr.mxu0 0.0
    %823 = vmatpush2.msra.mxu0 0.0
    %824 = vmatprep.subr.mxu0 0.0
    %825 = vmatpush2.msra.mxu0 0.0
    %826 = vmatprep.subr.mxu0 0.0
    %827 = vmatpush2.msra.mxu0 0.0
    %828 = vmatprep.subr.mxu0 0.0
    %829 = vmatpush2.msra.mxu0 0.0
    %830 = vmatprep.mubr.f32.mxu0 0.0
    %831 = vmatmul.mubr.f32.gmra.mxu0 %v764
    %v832 = vpop.f32.mrf.mxu0
    %v833 = vadd.f32 0.0, %v832
    %v834 = vpop.f32.mrf.mxu0
    %v835 = vadd.f32 0.0, %v834
    %836 = vdwg.mxu0
    %837 = vmatprep.subr.mxu0 0.0
    %838 = vmatpush1.msra.mxu0 0.0
    %839 = vmatprep.subr.mxu0 0.0
    %840 = vmatpush1.msra.mxu0 0.0
    %841 = vmatprep.subr.mxu0 0.0
    %842 = vmatpush1.msra.mxu0 0.0
    %843 = vmatprep.subr.mxu0 0.0
    %844 = vmatpush1.msra.mxu0 0.0
    %845 = vmatprep.subr.mxu0 0.0
    %846 = vmatpush1.msra.mxu0 0.0
    %847 = vmatprep.subr.mxu0 0.0
    %848 = vmatpush1.msra.mxu0 0.0
    %849 = vmatprep.subr.mxu0 0.0
    %850 = vmatpush1.msra.mxu0 0.0
    %851 = vmatprep.subr.mxu0 0.0
    %852 = vmatpush1.msra.mxu0 0.0
    %853 = vmatprep.subr.mxu0 0.0
    %854 = vmatpush1.msra.mxu0 0.0
    %855 = vmatprep.subr.mxu0 0.0
    %856 = vmatpush1.msra.mxu0 0.0
    %857 = vmatprep.subr.mxu0 0.0
    %858 = vmatpush1.msra.mxu0 0.0
    %859 = vmatprep.subr.mxu0 0.0
    %860 = vmatpush1.msra.mxu0 0.0
    %861 = vmatprep.subr.mxu0 0.0
    %862 = vmatpush1.msra.mxu0 %v237
    %863 = vmatprep.subr.mxu0 0.0
    %864 = vmatpush1.msra.mxu0 %v234
    %865 = vmatprep.subr.mxu0 0.0
    %866 = vmatpush1.msra.mxu0 %v231
    %867 = vmatprep.subr.mxu0 0.0
    %868 = vmatpush1.msra.mxu0 %v228
    %869 = vmatprep.subr.mxu0 0.0
    %870 = vmatpush2.msra.mxu0 0.0
    %871 = vmatprep.subr.mxu0 0.0
    %872 = vmatpush2.msra.mxu0 0.0
    %873 = vmatprep.subr.mxu0 0.0
    %874 = vmatpush2.msra.mxu0 0.0
    %875 = vmatprep.subr.mxu0 0.0
    %876 = vmatpush2.msra.mxu0 0.0
    %877 = vmatprep.subr.mxu0 0.0
    %878 = vmatpush2.msra.mxu0 0.0
    %879 = vmatprep.subr.mxu0 0.0
    %880 = vmatpush2.msra.mxu0 0.0
    %881 = vmatprep.subr.mxu0 0.0
    %882 = vmatpush2.msra.mxu0 0.0
    %883 = vmatprep.subr.mxu0 0.0
    %884 = vmatpush2.msra.mxu0 0.0
    %885 = vmatprep.subr.mxu0 0.0
    %886 = vmatpush2.msra.mxu0 0.0
    %887 = vmatprep.subr.mxu0 0.0
    %888 = vmatpush2.msra.mxu0 0.0
    %889 = vmatprep.subr.mxu0 0.0
    %890 = vmatpush2.msra.mxu0 0.0
    %891 = vmatprep.subr.mxu0 0.0
    %892 = vmatpush2.msra.mxu0 0.0
    %893 = vmatprep.subr.mxu0 0.0
    %894 = vmatpush2.msra.mxu0 0.0
    %895 = vmatprep.subr.mxu0 0.0
    %896 = vmatpush2.msra.mxu0 0.0
    %897 = vmatprep.subr.mxu0 0.0
    %898 = vmatpush2.msra.mxu0 0.0
    %899 = vmatprep.subr.mxu0 0.0
    %900 = vmatpush2.msra.mxu0 0.0
    %901 = vmatprep.mubr.f32.mxu0 0.0
    %902 = vmatmul.mubr.f32.gmra.mxu0 %v764
    %v903 = vpop.f32.mrf.mxu0
    %v904 = vadd.f32 0.0, %v903
    %v905 = vpop.f32.mrf.mxu0
    %906 = vdwg.mxu0
    %v909 = vrot.slane %v833, 5
    %v910 = vrot.slane %v835, 5
    %v913 = vadd.f32 %v152, %v909
    %v914 = vadd.f32 %v154, %v910
    %v915 = vxor.u32 %v913, 2147483648
    %v916 = vxor.u32 %v914, 2147483648
    %v917 = vmul.f32 %v915, 1.442695
    %v918 = vpow.pop %v917
    %v919 = vmul.f32 %v916, 1.442695
    %v920 = vpow.pop %v919
    %v921 = vadd.f32 %v918, 1.0
    %v922 = vadd.f32 %v920, 1.0
    %v923 = vrcp.pop %v921
    %v924 = vmul.f32 1.0, %v923
    %v925 = vrcp.pop %v922
    %v926 = vmul.f32 1.0, %v925
    %v927 = vadd.f32 %v904, %v238
    %v929 = vrot.slane %v927, 5
    %v931 = vmul.f32 %v924, %v929
    %v932 = vadd.f32 %v223, %v931
    %v933 = vtanh.pop %v932
    %v934 = vsub.f32 1.0, %v926
    %v935 = vmul.f32 %v934, %v933
    %v936 = vrot.slane %v761, 7
    %v938 = vmul.f32 %v926, %v936
    %v939 = vadd.f32 %v935, %v938
    %v941 = vrot.slane %v939, 3
    %v942 = vsel %vm240, %v941, 0
    %944 = vmatprep.subr.mxu0 0.0
    %945 = vmatpush1.msra.mxu0 0.0
    %946 = vmatprep.subr.mxu0 0.0
    %947 = vmatpush1.msra.mxu0 0.0
    %948 = vmatprep.subr.mxu0 0.0
    %949 = vmatpush1.msra.mxu0 0.0
    %950 = vmatprep.subr.mxu0 0.0
    %951 = vmatpush1.msra.mxu0 0.0
    %952 = vmatprep.subr.mxu0 0.0
    %953 = vmatpush1.msra.mxu0 0.0
    %954 = vmatprep.subr.mxu0 0.0
    %955 = vmatpush1.msra.mxu0 0.0
    %956 = vmatprep.subr.mxu0 0.0
    %957 = vmatpush1.msra.mxu0 0.0
    %958 = vmatprep.subr.mxu0 0.0
    %959 = vmatpush1.msra.mxu0 0.0
    %960 = vmatprep.subr.mxu0 0.0
    %961 = vmatpush1.msra.mxu0 0.0
    %962 = vmatprep.subr.mxu0 0.0
    %963 = vmatpush1.msra.mxu0 0.0
    %964 = vmatprep.subr.mxu0 0.0
    %965 = vmatpush1.msra.mxu0 0.0
    %966 = vmatprep.subr.mxu0 0.0
    %967 = vmatpush1.msra.mxu0 0.0
    %968 = vmatprep.subr.mxu0 %v236
    %969 = vmatpush1.msra.mxu0 %v235
    %970 = vmatprep.subr.mxu0 %v233
    %971 = vmatpush1.msra.mxu0 %v232
    %972 = vmatprep.subr.mxu0 %v230
    %973 = vmatpush1.msra.mxu0 %v229
    %974 = vmatprep.subr.mxu0 %v227
    %975 = vmatpush1.msra.mxu0 %v226
    %976 = vmatprep.subr.mxu0 0.0
    %977 = vmatpush2.msra.mxu0 0.0
    %978 = vmatprep.subr.mxu0 0.0
    %979 = vmatpush2.msra.mxu0 0.0
    %980 = vmatprep.subr.mxu0 0.0
    %981 = vmatpush2.msra.mxu0 0.0
    %982 = vmatprep.subr.mxu0 0.0
    %983 = vmatpush2.msra.mxu0 0.0
    %984 = vmatprep.subr.mxu0 0.0
    %985 = vmatpush2.msra.mxu0 0.0
    %986 = vmatprep.subr.mxu0 0.0
    %987 = vmatpush2.msra.mxu0 0.0
    %988 = vmatprep.subr.mxu0 0.0
    %989 = vmatpush2.msra.mxu0 0.0
    %990 = vmatprep.subr.mxu0 0.0
    %991 = vmatpush2.msra.mxu0 0.0
    %992 = vmatprep.subr.mxu0 0.0
    %993 = vmatpush2.msra.mxu0 0.0
    %994 = vmatprep.subr.mxu0 0.0
    %995 = vmatpush2.msra.mxu0 0.0
    %996 = vmatprep.subr.mxu0 0.0
    %997 = vmatpush2.msra.mxu0 0.0
    %998 = vmatprep.subr.mxu0 0.0
    %999 = vmatpush2.msra.mxu0 0.0
    %1000 = vmatprep.subr.mxu0 0.0
    %1001 = vmatpush2.msra.mxu0 0.0
    %1002 = vmatprep.subr.mxu0 0.0
    %1003 = vmatpush2.msra.mxu0 0.0
    %1004 = vmatprep.subr.mxu0 0.0
    %1005 = vmatpush2.msra.mxu0 0.0
    %1006 = vmatprep.subr.mxu0 0.0
    %1007 = vmatpush2.msra.mxu0 0.0
    %1008 = vmatprep.mubr.f32.mxu0 0.0
    %1009 = vmatmul.mubr.f32.gmra.mxu0 %v942
    %v1010 = vpop.f32.mrf.mxu0
    %v1011 = vadd.f32 0.0, %v1010
    %v1012 = vpop.f32.mrf.mxu0
    %v1013 = vadd.f32 0.0, %v1012
    %1014 = vdwg.mxu0
    %1015 = vmatprep.subr.mxu0 0.0
    %1016 = vmatpush1.msra.mxu0 0.0
    %1017 = vmatprep.subr.mxu0 0.0
    %1018 = vmatpush1.msra.mxu0 0.0
    %1019 = vmatprep.subr.mxu0 0.0
    %1020 = vmatpush1.msra.mxu0 0.0
    %1021 = vmatprep.subr.mxu0 0.0
    %1022 = vmatpush1.msra.mxu0 0.0
    %1023 = vmatprep.subr.mxu0 0.0
    %1024 = vmatpush1.msra.mxu0 0.0
    %1025 = vmatprep.subr.mxu0 0.0
    %1026 = vmatpush1.msra.mxu0 0.0
    %1027 = vmatprep.subr.mxu0 0.0
    %1028 = vmatpush1.msra.mxu0 0.0
    %1029 = vmatprep.subr.mxu0 0.0
    %1030 = vmatpush1.msra.mxu0 0.0
    %1031 = vmatprep.subr.mxu0 0.0
    %1032 = vmatpush1.msra.mxu0 0.0
    %1033 = vmatprep.subr.mxu0 0.0
    %1034 = vmatpush1.msra.mxu0 0.0
    %1035 = vmatprep.subr.mxu0 0.0
    %1036 = vmatpush1.msra.mxu0 0.0
    %1037 = vmatprep.subr.mxu0 0.0
    %1038 = vmatpush1.msra.mxu0 0.0
    %1039 = vmatprep.subr.mxu0 0.0
    %1040 = vmatpush1.msra.mxu0 %v237
    %1041 = vmatprep.subr.mxu0 0.0
    %1042 = vmatpush1.msra.mxu0 %v234
    %1043 = vmatprep.subr.mxu0 0.0
    %1044 = vmatpush1.msra.mxu0 %v231
    %1045 = vmatprep.subr.mxu0 0.0
    %1046 = vmatpush1.msra.mxu0 %v228
    %1047 = vmatprep.subr.mxu0 0.0
    %1048 = vmatpush2.msra.mxu0 0.0
    %1049 = vmatprep.subr.mxu0 0.0
    %1050 = vmatpush2.msra.mxu0 0.0
    %1051 = vmatprep.subr.mxu0 0.0
    %1052 = vmatpush2.msra.mxu0 0.0
    %1053 = vmatprep.subr.mxu0 0.0
    %1054 = vmatpush2.msra.mxu0 0.0
    %1055 = vmatprep.subr.mxu0 0.0
    %1056 = vmatpush2.msra.mxu0 0.0
    %1057 = vmatprep.subr.mxu0 0.0
    %1058 = vmatpush2.msra.mxu0 0.0
    %1059 = vmatprep.subr.mxu0 0.0
    %1060 = vmatpush2.msra.mxu0 0.0
    %1061 = vmatprep.subr.mxu0 0.0
    %1062 = vmatpush2.msra.mxu0 0.0
    %1063 = vmatprep.subr.mxu0 0.0
    %1064 = vmatpush2.msra.mxu0 0.0
    %1065 = vmatprep.subr.mxu0 0.0
    %1066 = vmatpush2.msra.mxu0 0.0
    %1067 = vmatprep.subr.mxu0 0.0
    %1068 = vmatpush2.msra.mxu0 0.0
    %1069 = vmatprep.subr.mxu0 0.0
    %1070 = vmatpush2.msra.mxu0 0.0
    %1071 = vmatprep.subr.mxu0 0.0
    %1072 = vmatpush2.msra.mxu0 0.0
    %1073 = vmatprep.subr.mxu0 0.0
    %1074 = vmatpush2.msra.mxu0 0.0
    %1075 = vmatprep.subr.mxu0 0.0
    %1076 = vmatpush2.msra.mxu0 0.0
    %1077 = vmatprep.subr.mxu0 0.0
    %1078 = vmatpush2.msra.mxu0 0.0
    %1079 = vmatprep.mubr.f32.mxu0 0.0
    %1080 = vmatmul.mubr.f32.gmra.mxu0 %v942
    %v1081 = vpop.f32.mrf.mxu0
    %v1082 = vadd.f32 0.0, %v1081
    %v1083 = vpop.f32.mrf.mxu0
    %1084 = vdwg.mxu0
    %v1087 = vrot.slane %v1011, 4
    %v1088 = vrot.slane %v1013, 4
    %v1091 = vadd.f32 %v152, %v1087
    %v1092 = vadd.f32 %v154, %v1088
    %v1093 = vxor.u32 %v1091, 2147483648
    %v1094 = vxor.u32 %v1092, 2147483648
    %v1095 = vmul.f32 %v1093, 1.442695
    %v1096 = vpow.pop %v1095
    %v1097 = vmul.f32 %v1094, 1.442695
    %v1098 = vpow.pop %v1097
    %v1099 = vadd.f32 %v1096, 1.0
    %v1100 = vadd.f32 %v1098, 1.0
    %v1101 = vrcp.pop %v1099
    %v1102 = vmul.f32 1.0, %v1101
    %v1103 = vrcp.pop %v1100
    %v1104 = vmul.f32 1.0, %v1103
    %v1105 = vadd.f32 %v1082, %v238
    %v1107 = vrot.slane %v1105, 4
    %v1109 = vmul.f32 %v1102, %v1107
    %v1110 = vadd.f32 %v223, %v1109
    %v1111 = vtanh.pop %v1110
    %v1112 = vsub.f32 1.0, %v1104
    %v1113 = vmul.f32 %v1112, %v1111
    %v1114 = vrot.slane %v939, 7
    %v1116 = vmul.f32 %v1104, %v1114
    %v1117 = vadd.f32 %v1113, %v1116
    %v1119 = vrot.slane %v1117, 4
    %v1120 = vsel %vm240, %v1119, 0
    %1122 = vmatprep.subr.mxu0 0.0
    %1123 = vmatpush1.msra.mxu0 0.0
    %1124 = vmatprep.subr.mxu0 0.0
    %1125 = vmatpush1.msra.mxu0 0.0
    %1126 = vmatprep.subr.mxu0 0.0
    %1127 = vmatpush1.msra.mxu0 0.0
    %1128 = vmatprep.subr.mxu0 0.0
    %1129 = vmatpush1.msra.mxu0 0.0
    %1130 = vmatprep.subr.mxu0 0.0
    %1131 = vmatpush1.msra.mxu0 0.0
    %1132 = vmatprep.subr.mxu0 0.0
    %1133 = vmatpush1.msra.mxu0 0.0
    %1134 = vmatprep.subr.mxu0 0.0
    %1135 = vmatpush1.msra.mxu0 0.0
    %1136 = vmatprep.subr.mxu0 0.0
    %1137 = vmatpush1.msra.mxu0 0.0
    %1138 = vmatprep.subr.mxu0 0.0
    %1139 = vmatpush1.msra.mxu0 0.0
    %1140 = vmatprep.subr.mxu0 0.0
    %1141 = vmatpush1.msra.mxu0 0.0
    %1142 = vmatprep.subr.mxu0 0.0
    %1143 = vmatpush1.msra.mxu0 0.0
    %1144 = vmatprep.subr.mxu0 0.0
    %1145 = vmatpush1.msra.mxu0 0.0
    %1146 = vmatprep.subr.mxu0 %v236
    %1147 = vmatpush1.msra.mxu0 %v235
    %1148 = vmatprep.subr.mxu0 %v233
    %1149 = vmatpush1.msra.mxu0 %v232
    %1150 = vmatprep.subr.mxu0 %v230
    %1151 = vmatpush1.msra.mxu0 %v229
    %1152 = vmatprep.subr.mxu0 %v227
    %1153 = vmatpush1.msra.mxu0 %v226
    %1154 = vmatprep.subr.mxu0 0.0
    %1155 = vmatpush2.msra.mxu0 0.0
    %1156 = vmatprep.subr.mxu0 0.0
    %1157 = vmatpush2.msra.mxu0 0.0
    %1158 = vmatprep.subr.mxu0 0.0
    %1159 = vmatpush2.msra.mxu0 0.0
    %1160 = vmatprep.subr.mxu0 0.0
    %1161 = vmatpush2.msra.mxu0 0.0
    %1162 = vmatprep.subr.mxu0 0.0
    %1163 = vmatpush2.msra.mxu0 0.0
    %1164 = vmatprep.subr.mxu0 0.0
    %1165 = vmatpush2.msra.mxu0 0.0
    %1166 = vmatprep.subr.mxu0 0.0
    %1167 = vmatpush2.msra.mxu0 0.0
    %1168 = vmatprep.subr.mxu0 0.0
    %1169 = vmatpush2.msra.mxu0 0.0
    %1170 = vmatprep.subr.mxu0 0.0
    %1171 = vmatpush2.msra.mxu0 0.0
    %1172 = vmatprep.subr.mxu0 0.0
    %1173 = vmatpush2.msra.mxu0 0.0
    %1174 = vmatprep.subr.mxu0 0.0
    %1175 = vmatpush2.msra.mxu0 0.0
    %1176 = vmatprep.subr.mxu0 0.0
    %1177 = vmatpush2.msra.mxu0 0.0
    %1178 = vmatprep.subr.mxu0 0.0
    %1179 = vmatpush2.msra.mxu0 0.0
    %1180 = vmatprep.subr.mxu0 0.0
    %1181 = vmatpush2.msra.mxu0 0.0
    %1182 = vmatprep.subr.mxu0 0.0
    %1183 = vmatpush2.msra.mxu0 0.0
    %1184 = vmatprep.subr.mxu0 0.0
    %1185 = vmatpush2.msra.mxu0 0.0
    %1186 = vmatprep.mubr.f32.mxu0 0.0
    %1187 = vmatmul.mubr.f32.gmra.mxu0 %v1120
    %v1188 = vpop.f32.mrf.mxu0
    %v1189 = vadd.f32 0.0, %v1188
    %v1190 = vpop.f32.mrf.mxu0
    %v1191 = vadd.f32 0.0, %v1190
    %1192 = vdwg.mxu0
    %1193 = vmatprep.subr.mxu0 0.0
    %1194 = vmatpush1.msra.mxu0 0.0
    %1195 = vmatprep.subr.mxu0 0.0
    %1196 = vmatpush1.msra.mxu0 0.0
    %1197 = vmatprep.subr.mxu0 0.0
    %1198 = vmatpush1.msra.mxu0 0.0
    %1199 = vmatprep.subr.mxu0 0.0
    %1200 = vmatpush1.msra.mxu0 0.0
    %1201 = vmatprep.subr.mxu0 0.0
    %1202 = vmatpush1.msra.mxu0 0.0
    %1203 = vmatprep.subr.mxu0 0.0
    %1204 = vmatpush1.msra.mxu0 0.0
    %1205 = vmatprep.subr.mxu0 0.0
    %1206 = vmatpush1.msra.mxu0 0.0
    %1207 = vmatprep.subr.mxu0 0.0
    %1208 = vmatpush1.msra.mxu0 0.0
    %1209 = vmatprep.subr.mxu0 0.0
    %1210 = vmatpush1.msra.mxu0 0.0
    %1211 = vmatprep.subr.mxu0 0.0
    %1212 = vmatpush1.msra.mxu0 0.0
    %1213 = vmatprep.subr.mxu0 0.0
    %1214 = vmatpush1.msra.mxu0 0.0
    %1215 = vmatprep.subr.mxu0 0.0
    %1216 = vmatpush1.msra.mxu0 0.0
    %1217 = vmatprep.subr.mxu0 0.0
    %1218 = vmatpush1.msra.mxu0 %v237
    %1219 = vmatprep.subr.mxu0 0.0
    %1220 = vmatpush1.msra.mxu0 %v234
    %1221 = vmatprep.subr.mxu0 0.0
    %1222 = vmatpush1.msra.mxu0 %v231
    %1223 = vmatprep.subr.mxu0 0.0
    %1224 = vmatpush1.msra.mxu0 %v228
    %1225 = vmatprep.subr.mxu0 0.0
    %1226 = vmatpush2.msra.mxu0 0.0
    %1227 = vmatprep.subr.mxu0 0.0
    %1228 = vmatpush2.msra.mxu0 0.0
    %1229 = vmatprep.subr.mxu0 0.0
    %1230 = vmatpush2.msra.mxu0 0.0
    %1231 = vmatprep.subr.mxu0 0.0
    %1232 = vmatpush2.msra.mxu0 0.0
    %1233 = vmatprep.subr.mxu0 0.0
    %1234 = vmatpush2.msra.mxu0 0.0
    %1235 = vmatprep.subr.mxu0 0.0
    %1236 = vmatpush2.msra.mxu0 0.0
    %1237 = vmatprep.subr.mxu0 0.0
    %1238 = vmatpush2.msra.mxu0 0.0
    %1239 = vmatprep.subr.mxu0 0.0
    %1240 = vmatpush2.msra.mxu0 0.0
    %1241 = vmatprep.subr.mxu0 0.0
    %1242 = vmatpush2.msra.mxu0 0.0
    %1243 = vmatprep.subr.mxu0 0.0
    %1244 = vmatpush2.msra.mxu0 0.0
    %1245 = vmatprep.subr.mxu0 0.0
    %1246 = vmatpush2.msra.mxu0 0.0
    %1247 = vmatprep.subr.mxu0 0.0
    %1248 = vmatpush2.msra.mxu0 0.0
    %1249 = vmatprep.subr.mxu0 0.0
    %1250 = vmatpush2.msra.mxu0 0.0
    %1251 = vmatprep.subr.mxu0 0.0
    %1252 = vmatpush2.msra.mxu0 0.0
    %1253 = vmatprep.subr.mxu0 0.0
    %1254 = vmatpush2.msra.mxu0 0.0
    %1255 = vmatprep.subr.mxu0 0.0
    %1256 = vmatpush2.msra.mxu0 0.0
    %1257 = vmatprep.mubr.f32.mxu0 0.0
    %1258 = vmatmul.mubr.f32.gmra.mxu0 %v1120
    %v1259 = vpop.f32.mrf.mxu0
    %v1260 = vadd.f32 0.0, %v1259
    %v1261 = vpop.f32.mrf.mxu0
    %1262 = vdwg.mxu0
    %v1265 = vrot.slane %v1189, 3
    %v1266 = vrot.slane %v1191, 3
    %v1269 = vadd.f32 %v152, %v1265
    %v1270 = vadd.f32 %v154, %v1266
    %v1271 = vxor.u32 %v1269, 2147483648
    %v1272 = vxor.u32 %v1270, 2147483648
    %v1273 = vmul.f32 %v1271, 1.442695
    %v1274 = vpow.pop %v1273
    %v1275 = vmul.f32 %v1272, 1.442695
    %v1276 = vpow.pop %v1275
    %v1277 = vadd.f32 %v1274, 1.0
    %v1278 = vadd.f32 %v1276, 1.0
    %v1279 = vrcp.pop %v1277
    %v1280 = vmul.f32 1.0, %v1279
    %v1281 = vrcp.pop %v1278
    %v1282 = vmul.f32 1.0, %v1281
    %v1283 = vadd.f32 %v1260, %v238
    %v1285 = vrot.slane %v1283, 3
    %v1287 = vmul.f32 %v1280, %v1285
    %v1288 = vadd.f32 %v223, %v1287
    %v1289 = vtanh.pop %v1288
    %v1290 = vsub.f32 1.0, %v1282
    %v1291 = vmul.f32 %v1290, %v1289
    %v1292 = vrot.slane %v1117, 7
    %v1294 = vmul.f32 %v1282, %v1292
    %v1295 = vadd.f32 %v1291, %v1294
    %v1297 = vrot.slane %v1295, 5
    %v1298 = vsel %vm240, %v1297, 0
    %1300 = vmatprep.subr.mxu0 0.0
    %1301 = vmatpush1.msra.mxu0 0.0
    %1302 = vmatprep.subr.mxu0 0.0
    %1303 = vmatpush1.msra.mxu0 0.0
    %1304 = vmatprep.subr.mxu0 0.0
    %1305 = vmatpush1.msra.mxu0 0.0
    %1306 = vmatprep.subr.mxu0 0.0
    %1307 = vmatpush1.msra.mxu0 0.0
    %1308 = vmatprep.subr.mxu0 0.0
    %1309 = vmatpush1.msra.mxu0 0.0
    %1310 = vmatprep.subr.mxu0 0.0
    %1311 = vmatpush1.msra.mxu0 0.0
    %1312 = vmatprep.subr.mxu0 0.0
    %1313 = vmatpush1.msra.mxu0 0.0
    %1314 = vmatprep.subr.mxu0 0.0
    %1315 = vmatpush1.msra.mxu0 0.0
    %1316 = vmatprep.subr.mxu0 0.0
    %1317 = vmatpush1.msra.mxu0 0.0
    %1318 = vmatprep.subr.mxu0 0.0
    %1319 = vmatpush1.msra.mxu0 0.0
    %1320 = vmatprep.subr.mxu0 0.0
    %1321 = vmatpush1.msra.mxu0 0.0
    %1322 = vmatprep.subr.mxu0 0.0
    %1323 = vmatpush1.msra.mxu0 0.0
    %1324 = vmatprep.subr.mxu0 %v236
    %1325 = vmatpush1.msra.mxu0 %v235
    %1326 = vmatprep.subr.mxu0 %v233
    %1327 = vmatpush1.msra.mxu0 %v232
    %1328 = vmatprep.subr.mxu0 %v230
    %1329 = vmatpush1.msra.mxu0 %v229
    %1330 = vmatprep.subr.mxu0 %v227
    %1331 = vmatpush1.msra.mxu0 %v226
    %1332 = vmatprep.subr.mxu0 0.0
    %1333 = vmatpush2.msra.mxu0 0.0
    %1334 = vmatprep.subr.mxu0 0.0
    %1335 = vmatpush2.msra.mxu0 0.0
    %1336 = vmatprep.subr.mxu0 0.0
    %1337 = vmatpush2.msra.mxu0 0.0
    %1338 = vmatprep.subr.mxu0 0.0
    %1339 = vmatpush2.msra.mxu0 0.0
    %1340 = vmatprep.subr.mxu0 0.0
    %1341 = vmatpush2.msra.mxu0 0.0
    %1342 = vmatprep.subr.mxu0 0.0
    %1343 = vmatpush2.msra.mxu0 0.0
    %1344 = vmatprep.subr.mxu0 0.0
    %1345 = vmatpush2.msra.mxu0 0.0
    %1346 = vmatprep.subr.mxu0 0.0
    %1347 = vmatpush2.msra.mxu0 0.0
    %1348 = vmatprep.subr.mxu0 0.0
    %1349 = vmatpush2.msra.mxu0 0.0
    %1350 = vmatprep.subr.mxu0 0.0
    %1351 = vmatpush2.msra.mxu0 0.0
    %1352 = vmatprep.subr.mxu0 0.0
    %1353 = vmatpush2.msra.mxu0 0.0
    %1354 = vmatprep.subr.mxu0 0.0
    %1355 = vmatpush2.msra.mxu0 0.0
    %1356 = vmatprep.subr.mxu0 0.0
    %1357 = vmatpush2.msra.mxu0 0.0
    %1358 = vmatprep.subr.mxu0 0.0
    %1359 = vmatpush2.msra.mxu0 0.0
    %1360 = vmatprep.subr.mxu0 0.0
    %1361 = vmatpush2.msra.mxu0 0.0
    %1362 = vmatprep.subr.mxu0 0.0
    %1363 = vmatpush2.msra.mxu0 0.0
    %1364 = vmatprep.mubr.f32.mxu0 0.0
    %1365 = vmatmul.mubr.f32.gmra.mxu0 %v1298
    %v1366 = vpop.f32.mrf.mxu0
    %v1367 = vadd.f32 0.0, %v1366
    %v1368 = vpop.f32.mrf.mxu0
    %v1369 = vadd.f32 0.0, %v1368
    %1370 = vdwg.mxu0
    %1371 = vmatprep.subr.mxu0 0.0
    %1372 = vmatpush1.msra.mxu0 0.0
    %1373 = vmatprep.subr.mxu0 0.0
    %1374 = vmatpush1.msra.mxu0 0.0
    %1375 = vmatprep.subr.mxu0 0.0
    %1376 = vmatpush1.msra.mxu0 0.0
    %1377 = vmatprep.subr.mxu0 0.0
    %1378 = vmatpush1.msra.mxu0 0.0
    %1379 = vmatprep.subr.mxu0 0.0
    %1380 = vmatpush1.msra.mxu0 0.0
    %1381 = vmatprep.subr.mxu0 0.0
    %1382 = vmatpush1.msra.mxu0 0.0
    %1383 = vmatprep.subr.mxu0 0.0
    %1384 = vmatpush1.msra.mxu0 0.0
    %1385 = vmatprep.subr.mxu0 0.0
    %1386 = vmatpush1.msra.mxu0 0.0
    %1387 = vmatprep.subr.mxu0 0.0
    %1388 = vmatpush1.msra.mxu0 0.0
    %1389 = vmatprep.subr.mxu0 0.0
    %1390 = vmatpush1.msra.mxu0 0.0
    %1391 = vmatprep.subr.mxu0 0.0
    %1392 = vmatpush1.msra.mxu0 0.0
    %1393 = vmatprep.subr.mxu0 0.0
    %1394 = vmatpush1.msra.mxu0 0.0
    %1395 = vmatprep.subr.mxu0 0.0
    %1396 = vmatpush1.msra.mxu0 %v237
    %1397 = vmatprep.subr.mxu0 0.0
    %1398 = vmatpush1.msra.mxu0 %v234
    %1399 = vmatprep.subr.mxu0 0.0
    %1400 = vmatpush1.msra.mxu0 %v231
    %1401 = vmatprep.subr.mxu0 0.0
    %1402 = vmatpush1.msra.mxu0 %v228
    %1403 = vmatprep.subr.mxu0 0.0
    %1404 = vmatpush2.msra.mxu0 0.0
    %1405 = vmatprep.subr.mxu0 0.0
    %1406 = vmatpush2.msra.mxu0 0.0
    %1407 = vmatprep.subr.mxu0 0.0
    %1408 = vmatpush2.msra.mxu0 0.0
    %1409 = vmatprep.subr.mxu0 0.0
    %1410 = vmatpush2.msra.mxu0 0.0
    %1411 = vmatprep.subr.mxu0 0.0
    %1412 = vmatpush2.msra.mxu0 0.0
    %1413 = vmatprep.subr.mxu0 0.0
    %1414 = vmatpush2.msra.mxu0 0.0
    %1415 = vmatprep.subr.mxu0 0.0
    %1416 = vmatpush2.msra.mxu0 0.0
    %1417 = vmatprep.subr.mxu0 0.0
    %1418 = vmatpush2.msra.mxu0 0.0
    %1419 = vmatprep.subr.mxu0 0.0
    %1420 = vmatpush2.msra.mxu0 0.0
    %1421 = vmatprep.subr.mxu0 0.0
    %1422 = vmatpush2.msra.mxu0 0.0
    %1423 = vmatprep.subr.mxu0 0.0
    %1424 = vmatpush2.msra.mxu0 0.0
    %1425 = vmatprep.subr.mxu0 0.0
    %1426 = vmatpush2.msra.mxu0 0.0
    %1427 = vmatprep.subr.mxu0 0.0
    %1428 = vmatpush2.msra.mxu0 0.0
    %1429 = vmatprep.subr.mxu0 0.0
    %1430 = vmatpush2.msra.mxu0 0.0
    %1431 = vmatprep.subr.mxu0 0.0
    %1432 = vmatpush2.msra.mxu0 0.0
    %1433 = vmatprep.subr.mxu0 0.0
    %1434 = vmatpush2.msra.mxu0 0.0
    %1435 = vmatprep.mubr.f32.mxu0 0.0
    %1436 = vmatmul.mubr.f32.gmra.mxu0 %v1298
    %v1437 = vpop.f32.mrf.mxu0
    %v1438 = vadd.f32 0.0, %v1437
    %v1439 = vpop.f32.mrf.mxu0
    %1440 = vdwg.mxu0
    %v1443 = vrot.slane %v1367, 2
    %v1444 = vrot.slane %v1369, 2
    %v1447 = vadd.f32 %v152, %v1443
    %v1448 = vadd.f32 %v154, %v1444
    %v1449 = vxor.u32 %v1447, 2147483648
    %v1450 = vxor.u32 %v1448, 2147483648
    %v1451 = vmul.f32 %v1449, 1.442695
    %v1452 = vpow.pop %v1451
    %v1453 = vmul.f32 %v1450, 1.442695
    %v1454 = vpow.pop %v1453
    %v1455 = vadd.f32 %v1452, 1.0
    %v1456 = vadd.f32 %v1454, 1.0
    %v1457 = vrcp.pop %v1455
    %v1458 = vmul.f32 1.0, %v1457
    %v1459 = vrcp.pop %v1456
    %v1460 = vmul.f32 1.0, %v1459
    %v1461 = vadd.f32 %v1438, %v238
    %v1463 = vrot.slane %v1461, 2
    %v1465 = vmul.f32 %v1458, %v1463
    %v1466 = vadd.f32 %v223, %v1465
    %v1467 = vtanh.pop %v1466
    %v1468 = vsub.f32 1.0, %v1460
    %v1469 = vmul.f32 %v1468, %v1467
    %v1470 = vrot.slane %v1295, 7
    %v1472 = vmul.f32 %v1460, %v1470
    %v1473 = vadd.f32 %v1469, %v1472
    %v1475 = vrot.slane %v1473, 6
    %v1476 = vsel %vm240, %v1475, 0
    %1478 = vmatprep.subr.mxu0 0.0
    %1479 = vmatpush1.msra.mxu0 0.0
    %1480 = vmatprep.subr.mxu0 0.0
    %1481 = vmatpush1.msra.mxu0 0.0
    %1482 = vmatprep.subr.mxu0 0.0
    %1483 = vmatpush1.msra.mxu0 0.0
    %1484 = vmatprep.subr.mxu0 0.0
    %1485 = vmatpush1.msra.mxu0 0.0
    %1486 = vmatprep.subr.mxu0 0.0
    %1487 = vmatpush1.msra.mxu0 0.0
    %1488 = vmatprep.subr.mxu0 0.0
    %1489 = vmatpush1.msra.mxu0 0.0
    %1490 = vmatprep.subr.mxu0 0.0
    %1491 = vmatpush1.msra.mxu0 0.0
    %1492 = vmatprep.subr.mxu0 0.0
    %1493 = vmatpush1.msra.mxu0 0.0
    %1494 = vmatprep.subr.mxu0 0.0
    %1495 = vmatpush1.msra.mxu0 0.0
    %1496 = vmatprep.subr.mxu0 0.0
    %1497 = vmatpush1.msra.mxu0 0.0
    %1498 = vmatprep.subr.mxu0 0.0
    %1499 = vmatpush1.msra.mxu0 0.0
    %1500 = vmatprep.subr.mxu0 0.0
    %1501 = vmatpush1.msra.mxu0 0.0
    %1502 = vmatprep.subr.mxu0 %v236
    %1503 = vmatpush1.msra.mxu0 %v235
    %1504 = vmatprep.subr.mxu0 %v233
    %1505 = vmatpush1.msra.mxu0 %v232
    %1506 = vmatprep.subr.mxu0 %v230
    %1507 = vmatpush1.msra.mxu0 %v229
    %1508 = vmatprep.subr.mxu0 %v227
    %1509 = vmatpush1.msra.mxu0 %v226
    %1510 = vmatprep.subr.mxu0 0.0
    %1511 = vmatpush2.msra.mxu0 0.0
    %1512 = vmatprep.subr.mxu0 0.0
    %1513 = vmatpush2.msra.mxu0 0.0
    %1514 = vmatprep.subr.mxu0 0.0
    %1515 = vmatpush2.msra.mxu0 0.0
    %1516 = vmatprep.subr.mxu0 0.0
    %1517 = vmatpush2.msra.mxu0 0.0
    %1518 = vmatprep.subr.mxu0 0.0
    %1519 = vmatpush2.msra.mxu0 0.0
    %1520 = vmatprep.subr.mxu0 0.0
    %1521 = vmatpush2.msra.mxu0 0.0
    %1522 = vmatprep.subr.mxu0 0.0
    %1523 = vmatpush2.msra.mxu0 0.0
    %1524 = vmatprep.subr.mxu0 0.0
    %1525 = vmatpush2.msra.mxu0 0.0
    %1526 = vmatprep.subr.mxu0 0.0
    %1527 = vmatpush2.msra.mxu0 0.0
    %1528 = vmatprep.subr.mxu0 0.0
    %1529 = vmatpush2.msra.mxu0 0.0
    %1530 = vmatprep.subr.mxu0 0.0
    %1531 = vmatpush2.msra.mxu0 0.0
    %1532 = vmatprep.subr.mxu0 0.0
    %1533 = vmatpush2.msra.mxu0 0.0
    %1534 = vmatprep.subr.mxu0 0.0
    %1535 = vmatpush2.msra.mxu0 0.0
    %1536 = vmatprep.subr.mxu0 0.0
    %1537 = vmatpush2.msra.mxu0 0.0
    %1538 = vmatprep.subr.mxu0 0.0
    %1539 = vmatpush2.msra.mxu0 0.0
    %1540 = vmatprep.subr.mxu0 0.0
    %1541 = vmatpush2.msra.mxu0 0.0
    %1542 = vmatprep.mubr.f32.mxu0 0.0
    %1543 = vmatmul.mubr.f32.gmra.mxu0 %v1476
    %v1544 = vpop.f32.mrf.mxu0
    %v1545 = vadd.f32 0.0, %v1544
    %v1546 = vpop.f32.mrf.mxu0
    %v1547 = vadd.f32 0.0, %v1546
    %1548 = vdwg.mxu0
    %1549 = vmatprep.subr.mxu0 0.0
    %1550 = vmatpush1.msra.mxu0 0.0
    %1551 = vmatprep.subr.mxu0 0.0
    %1552 = vmatpush1.msra.mxu0 0.0
    %1553 = vmatprep.subr.mxu0 0.0
    %1554 = vmatpush1.msra.mxu0 0.0
    %1555 = vmatprep.subr.mxu0 0.0
    %1556 = vmatpush1.msra.mxu0 0.0
    %1557 = vmatprep.subr.mxu0 0.0
    %1558 = vmatpush1.msra.mxu0 0.0
    %1559 = vmatprep.subr.mxu0 0.0
    %1560 = vmatpush1.msra.mxu0 0.0
    %1561 = vmatprep.subr.mxu0 0.0
    %1562 = vmatpush1.msra.mxu0 0.0
    %1563 = vmatprep.subr.mxu0 0.0
    %1564 = vmatpush1.msra.mxu0 0.0
    %1565 = vmatprep.subr.mxu0 0.0
    %1566 = vmatpush1.msra.mxu0 0.0
    %1567 = vmatprep.subr.mxu0 0.0
    %1568 = vmatpush1.msra.mxu0 0.0
    %1569 = vmatprep.subr.mxu0 0.0
    %1570 = vmatpush1.msra.mxu0 0.0
    %1571 = vmatprep.subr.mxu0 0.0
    %1572 = vmatpush1.msra.mxu0 0.0
    %1573 = vmatprep.subr.mxu0 0.0
    %1574 = vmatpush1.msra.mxu0 %v237
    %1575 = vmatprep.subr.mxu0 0.0
    %1576 = vmatpush1.msra.mxu0 %v234
    %1577 = vmatprep.subr.mxu0 0.0
    %1578 = vmatpush1.msra.mxu0 %v231
    %1579 = vmatprep.subr.mxu0 0.0
    %1580 = vmatpush1.msra.mxu0 %v228
    %1581 = vmatprep.subr.mxu0 0.0
    %1582 = vmatpush2.msra.mxu0 0.0
    %1583 = vmatprep.subr.mxu0 0.0
    %1584 = vmatpush2.msra.mxu0 0.0
    %1585 = vmatprep.subr.mxu0 0.0
    %1586 = vmatpush2.msra.mxu0 0.0
    %1587 = vmatprep.subr.mxu0 0.0
    %1588 = vmatpush2.msra.mxu0 0.0
    %1589 = vmatprep.subr.mxu0 0.0
    %1590 = vmatpush2.msra.mxu0 0.0
    %1591 = vmatprep.subr.mxu0 0.0
    %1592 = vmatpush2.msra.mxu0 0.0
    %1593 = vmatprep.subr.mxu0 0.0
    %1594 = vmatpush2.msra.mxu0 0.0
    %1595 = vmatprep.subr.mxu0 0.0
    %1596 = vmatpush2.msra.mxu0 0.0
    %1597 = vmatprep.subr.mxu0 0.0
    %1598 = vmatpush2.msra.mxu0 0.0
    %1599 = vmatprep.subr.mxu0 0.0
    %1600 = vmatpush2.msra.mxu0 0.0
    %1601 = vmatprep.subr.mxu0 0.0
    %1602 = vmatpush2.msra.mxu0 0.0
    %1603 = vmatprep.subr.mxu0 0.0
    %1604 = vmatpush2.msra.mxu0 0.0
    %1605 = vmatprep.subr.mxu0 0.0
    %1606 = vmatpush2.msra.mxu0 0.0
    %1607 = vmatprep.subr.mxu0 0.0
    %1608 = vmatpush2.msra.mxu0 0.0
    %1609 = vmatprep.subr.mxu0 0.0
    %1610 = vmatpush2.msra.mxu0 0.0
    %1611 = vmatprep.subr.mxu0 0.0
    %1612 = vmatpush2.msra.mxu0 0.0
    %1613 = vmatprep.mubr.f32.mxu0 0.0
    %1614 = vmatmul.mubr.f32.gmra.mxu0 %v1476
    %v1615 = vpop.f32.mrf.mxu0
    %v1616 = vadd.f32 0.0, %v1615
    %v1617 = vpop.f32.mrf.mxu0
    %1618 = vdwg.mxu0
    %v1621 = vrot.slane %v1545, 1
    %v1622 = vrot.slane %v1547, 1
    %v1625 = vadd.f32 %v152, %v1621
    %v1626 = vadd.f32 %v154, %v1622
    %v1627 = vxor.u32 %v1625, 2147483648
    %v1628 = vxor.u32 %v1626, 2147483648
    %v1629 = vmul.f32 %v1627, 1.442695
    %v1630 = vpow.pop %v1629
    %v1631 = vmul.f32 %v1628, 1.442695
    %v1632 = vpow.pop %v1631
    %v1633 = vadd.f32 %v1630, 1.0
    %v1634 = vadd.f32 %v1632, 1.0
    %v1635 = vrcp.pop %v1633
    %v1636 = vmul.f32 1.0, %v1635
    %v1637 = vrcp.pop %v1634
    %v1638 = vmul.f32 1.0, %v1637
    %v1639 = vadd.f32 %v1616, %v238
    %v1641 = vrot.slane %v1639, 1
    %v1643 = vmul.f32 %v1636, %v1641
    %v1644 = vadd.f32 %v223, %v1643
    %v1645 = vtanh.pop %v1644
    %v1646 = vsub.f32 1.0, %v1638
    %v1647 = vmul.f32 %v1646, %v1645
    %v1648 = vrot.slane %v1473, 7
    %v1650 = vmul.f32 %v1638, %v1648
    %v1651 = vadd.f32 %v1647, %v1650
    %vm1652 = vcmask 1040384
    %v1653 = vsel %vm1652, %v406, %v583
    %vm1654 = vcmask 1041408
    %v1655 = vsel %vm1654, %v1653, %v761
    %vm1656 = vcmask 1042432
    %v1657 = vsel %vm1656, %v1655, %v939
    %vm1658 = vcmask 1043456
    %v1659 = vsel %vm1658, %v1657, %v1117
    %vm1660 = vcmask 1044480
    %v1661 = vsel %vm1660, %v1659, %v1295
    %vm1662 = vcmask 1045504
    %v1663 = vsel %vm1662, %v1661, %v1473
    %vm1664 = vcmask 1046528
    %v1665 = vsel %vm1664, %v1663, %v1651
    %1666 = vst [vmem:[%s5] sm:$0xff] %v1665
    // Predicated region
    $region30: #{encoder_rnn_forward.1} parent=1 // pred_check
      _
    $region31: #{encoder_rnn_forward.1} parent=1 // pred_check_branch
      %1668 = sbr.rel (0) target = $region33
    $region32: #{encoder_rnn_forward.1} parent=1 // pred_region
      _
    $region33: #{encoder_rnn_forward.1} parent=1 // pred_fallthru
      _
    // Predicated region
    $region34: #{encoder_rnn_forward.1} parent=1 // pred_check
      _
    $region35: #{encoder_rnn_forward.1} parent=1 // pred_check_branch
      %1670 = sbr.rel (0) target = $region37
    $region36: #{encoder_rnn_forward.1} parent=1 // pred_region
      _
    $region37: #{encoder_rnn_forward.1} parent=1 // pred_fallthru
      _
    %1671 = vsyncpa [#allocation3], 1
    %1672 = vsyncpa [#allocation5], 1

</llo_original>
